<compile_context>
chip_gen: v7x
topology: tpu7x:2x2x1
jax: 0.10.0
libtpu: 0.0.40
codegen_flags: <defaults>
</compile_context>

<pallas_src>
import jax
import jax.numpy as jnp
from jax import lax
from jax.experimental import pallas as pl
from jax.experimental.pallas import tpu as pltpu

# Original module:
#   encoder: Linear(13,20) ReLU Linear(20,10) ReLU Linear(10,6)
#   decoder: Linear(6,10)  ReLU Linear(10,20) ReLU Linear(20,13)
_DIMS = [(13, 20), (20, 10), (10, 6), (6, 10), (10, 20), (20, 13)]  # (in, out)
_NO_RELU = (2, 5)          # encoder[-1] and decoder[-1] have no ReLU
_PAD = 24                  # padded slab rows/cols (multiple of 8 sublanes)
_CHUNK = 512               # lanes per in-kernel sub-chunk (keeps h in vregs)
_HIGHEST = jax.lax.Precision.HIGHEST

# Per (fused) layer: (weight-row view, weight-col view, apply ReLU).
# Views are round_up(real_dim, 8); padded rows/cols are exact zeros.
_LAYERS = (
    (24, 13, True),        # 13 -> 20, ReLU
    (16, 24, True),        # 20 -> 10, ReLU
    (16, 16, True),        # fused 10 -> (6) -> 10, ReLU (no activation between)
    (24, 16, True),        # 10 -> 20, ReLU
    (16, 24, False),       # 20 -> 13
)


def _ae_kernel(x_ref, w_ref, b_ref, o_ref):
    # x_ref: (13, tb)   w_ref: (5, 24, 24)   b_ref: (5, 24, 1)   o_ref: (13, tb)
    tb = x_ref.shape[1]

    def run_layers(h):
        # h: (13, chunk) -> (16, chunk); all intermediates stay in vregs.
        for layer, (ro, ri, relu) in enumerate(_LAYERS):
            h = jnp.dot(w_ref[layer, :ro, :ri], h,
                        preferred_element_type=jnp.float32,
                        precision=_HIGHEST) + b_ref[layer, :ro, :]
            if relu:
                h = jnp.maximum(h, 0.0)
        return h[:13, :]

    if tb <= _CHUNK:
        # Small tile: single shot, no dynamic slicing.
        o_ref[...] = run_layers(x_ref[...]).astype(o_ref.dtype)
    else:
        # tb is a multiple of _CHUNK (wrapper guarantee).  Run all layers per
        # 512-lane sub-chunk so activations never spill to VMEM between layers.
        n_chunks = tb // _CHUNK

        def body(c, carry):
            start = pl.multiple_of(c * _CHUNK, 128)
            h = run_layers(x_ref[:, pl.ds(start, _CHUNK)])
            o_ref[:, pl.ds(start, _CHUNK)] = h.astype(o_ref.dtype)
            return carry

        lax.fori_loop(0, n_chunks, body, 0, unroll=True)


def pack_params(params):
    """Pack the 6 (W, b) pairs into padded slabs.  Call ONCE, outside the hot path.

    Fuses encoder[-1] with decoder[0] (no nonlinearity between them):
        W' = W3 @ W2,   b' = W3 @ b2 + b3
    Weights stay PyTorch-native (out_features, in_features)."""
    ps = [(jnp.asarray(w, jnp.float32), jnp.asarray(b, jnp.float32)) for w, b in params]
    (w0, b0), (w1, b1), (w2, b2), (w3, b3), (w4, b4), (w5, b5) = ps
    wf = jnp.dot(w3, w2, precision=_HIGHEST)             # (10, 6) @ (6, 10) -> (10, 10)
    bf = jnp.dot(w3, b2, precision=_HIGHEST) + b3        # (10,)
    fused = [(w0, b0), (w1, b1), (wf, bf), (w4, b4), (w5, b5)]

    w_slab = jnp.zeros((len(fused), _PAD, _PAD), jnp.float32)
    b_slab = jnp.zeros((len(fused), _PAD, 1), jnp.float32)
    for i, (w, b) in enumerate(fused):
        out_d, in_d = w.shape
        w_slab = w_slab.at[i, :out_d, :in_d].set(w)
        b_slab = b_slab.at[i, :out_d, 0].set(b)
    return w_slab, b_slab


def _pick_tile_b(batch, max_tile_b):
    """Adaptive lane tile: large enough to amortize the ~0.35us per-grid-step
    overhead, capped so there are >= ~4 grid steps where possible (keeps both
    v7x TensorCores busy); always a multiple of _CHUNK (or the full batch)."""
    if batch <= _CHUNK:
        return batch                               # one full-array block
    quarter = -(-batch // 4)                       # cdiv(batch, 4)
    tb = -(-quarter // _CHUNK) * _CHUNK            # round up to multiple of _CHUNK
    return max(_CHUNK, min(max_tile_b, tb))


def boston_housing_ae_lanes(xt, w_slab, b_slab, *, max_tile_b=4096):
    """Transpose-free core: xt is (13, B) f32, returns (13, B) f32.

    Use directly when adjacent ops already produce/consume the batch-on-lanes
    layout (avoids two full HBM transpose passes)."""
    feat, batch = xt.shape
    assert feat == 13
    tb = _pick_tile_b(batch, max_tile_b)
    grid = (pl.cdiv(batch, tb),)
    n_layers = len(_LAYERS)
    # Ragged tails: the partial last block computes on undefined lanes; matmul
    # columns are independent and Pallas' masked partial-block writeback
    # discards them, so this is benign (no traps on TPU f32).
    return pl.pallas_call(
        _ae_kernel,
        out_shape=jax.ShapeDtypeStruct((13, batch), jnp.float32),
        grid_spec=pltpu.PrefetchScalarGridSpec(
            num_scalar_prefetch=0,
            grid=grid,
            in_specs=[
                pl.BlockSpec((13, tb), lambda i: (0, i)),
                pl.BlockSpec((n_layers, _PAD, _PAD), lambda i: (0, 0, 0)),
                pl.BlockSpec((n_layers, _PAD, 1), lambda i: (0, 0, 0)),
            ],
            out_specs=pl.BlockSpec((13, tb), lambda i: (0, i)),
        ),
        compiler_params=pltpu.CompilerParams(
            dimension_semantics=("parallel",)),        # megacore / dual-TC sharding
    )(xt, w_slab, b_slab)


def boston_housing_ae(x, w_slab, b_slab, *, max_tile_b=4096):
    """Module-compatible forward: x reshapeable to (-1, 13); returns (B, 13)."""
    x = jnp.asarray(x, jnp.float32).reshape(-1, 13)
    out_t = boston_housing_ae_lanes(x.T, w_slab, b_slab, max_tile_b=max_tile_b)
    return out_t.T


def init_params(key):
    """nn.Linear default init (U[-1/sqrt(fan_in), +]); W stored as (out, in)."""
    params = []
    for (fan_in, fan_out) in _DIMS:
        key, kw, kb = jax.random.split(key, 3)
        bound = 1.0 / jnp.sqrt(fan_in)
        w = jax.random.uniform(kw, (fan_out, fan_in), jnp.float32, -bound, bound)
        b = jax.random.uniform(kb, (fan_out,), jnp.float32, -bound, bound)
        params.append((w, b))
    return params


def reference_forward(x, params):
    """Pure-JAX reference matching the PyTorch module (unfused, exact f32)."""
    h = jnp.asarray(x, jnp.float32).reshape(-1, 13)
    for i, (w, b) in enumerate(params):
        h = jnp.dot(h, w.T, precision=_HIGHEST) + b
        if i not in _NO_RELU:
            h = jnp.maximum(h, 0.0)
    return h


if __name__ == "__main__":
    key = jax.random.PRNGKey(0)
    kx, kp, kx2 = jax.random.split(key, 3)

    params = init_params(kp)
    w_slab, b_slab = pack_params(params)        # packed once, outside the hot path
    fwd = jax.jit(boston_housing_ae)

    # Small demo batch (the module reshapes its input to (-1, 13)).
    B = 8
    x = jax.random.normal(kx, (B, 13), jnp.float32)
    out = jax.block_until_ready(fwd(x, w_slab, b_slab))
    ref = reference_forward(x, params)
    assert out.shape == (B, 13)
    assert jnp.allclose(out, ref, atol=1e-4, rtol=1e-4), "mismatch (small batch)"

    # Exercise the tiled path: multiple grid steps, the in-kernel sub-chunk
    # loop, and a ragged final block.
    B2 = 2600
    x2 = jax.random.normal(kx2, (B2, 13), jnp.float32)
    out2 = jax.block_until_ready(fwd(x2, w_slab, b_slab))
    ref2 = reference_forward(x2, params)
    assert out2.shape == (B2, 13)
    assert jnp.allclose(out2, ref2, atol=1e-4, rtol=1e-4), "mismatch (tiled batch)"

    print("KERNEL_OK")
</pallas_src>

<mosaic_0001>
module attributes {stable_mosaic.version = 11 : i64} {
  func.func @_ae_kernel(%arg0: i32, %arg1: memref<13x8xf32, #tpu.memory_space<vmem>>, %arg2: memref<5x24x24xf32, #tpu.memory_space<vmem>>, %arg3: memref<5x24x1xf32, #tpu.memory_space<vmem>>, %arg4: memref<13x8xf32, #tpu.memory_space<vmem>>) attributes {dimension_semantics = [#tpu.dimension_semantics<parallel>], iteration_bounds = array<i64: 1>, scalar_prefetch = 0 : i64, scratch_operands = 0 : i64, tpu.core_type = #tpu.core_type<tc>, window_params = [{transform_indices = @transform_0, window_bounds = array<i64: 13, 8>}, {pipeline_mode = #tpu.pipeline_mode<synchronous>, transform_indices = @transform_1, window_bounds = array<i64: 5, 24, 24>}, {pipeline_mode = #tpu.pipeline_mode<synchronous>, transform_indices = @transform_2, window_bounds = array<i64: 5, 24, 1>}, {transform_indices = @transform_3, window_bounds = array<i64: 13, 8>}]} {
    %c0 = arith.constant 0 : index
    %c0_0 = arith.constant 0 : index
    %0 = vector.load %arg1[%c0, %c0_0] : memref<13x8xf32, #tpu.memory_space<vmem>>, vector<13x8xf32>
    %c0_1 = arith.constant 0 : index
    %c0_2 = arith.constant 0 : index
    %c0_3 = arith.constant 0 : index
    %1 = vector.load %arg2[%c0_1, %c0_2, %c0_3] : memref<5x24x24xf32, #tpu.memory_space<vmem>>, vector<1x24x13xf32>
    %2 = vector.shape_cast %1 : vector<1x24x13xf32> to vector<24x13xf32>
    %cst = arith.constant dense<0.000000e+00> : vector<24x8xf32>
    %3 = tpu.matmul %2, %0, %cst {dimension_numbers = #tpu.dot_dimension_numbers<[1], [0], [0], [1], [0, 0, 1, 1], [], []>, precision = #tpu.contract_precision<fp32>} : vector<24x13xf32>, vector<13x8xf32>, vector<24x8xf32> -> vector<24x8xf32>
    %c0_4 = arith.constant 0 : index
    %c0_5 = arith.constant 0 : index
    %c0_6 = arith.constant 0 : index
    %4 = vector.load %arg3[%c0_4, %c0_5, %c0_6] : memref<5x24x1xf32, #tpu.memory_space<vmem>>, vector<1x24x1xf32>
    %5 = vector.shape_cast %4 : vector<1x24x1xf32> to vector<24x1xf32>
    %6 = vector.broadcast %5 : vector<24x1xf32> to vector<24x8xf32>
    %7 = arith.addf %3, %6 : vector<24x8xf32>
    %cst_7 = arith.constant 0.000000e+00 : f32
    %8 = vector.broadcast %cst_7 : f32 to vector<24x8xf32>
    %9 = arith.maximumf %7, %8 : vector<24x8xf32>
    %c1 = arith.constant 1 : index
    %c0_8 = arith.constant 0 : index
    %c0_9 = arith.constant 0 : index
    %10 = vector.load %arg2[%c1, %c0_8, %c0_9] : memref<5x24x24xf32, #tpu.memory_space<vmem>>, vector<1x16x24xf32>
    %11 = vector.shape_cast %10 : vector<1x16x24xf32> to vector<16x24xf32>
    %cst_10 = arith.constant dense<0.000000e+00> : vector<16x8xf32>
    %12 = tpu.matmul %11, %9, %cst_10 {dimension_numbers = #tpu.dot_dimension_numbers<[1], [0], [0], [1], [0, 0, 1, 1], [], []>, precision = #tpu.contract_precision<fp32>} : vector<16x24xf32>, vector<24x8xf32>, vector<16x8xf32> -> vector<16x8xf32>
    %c1_11 = arith.constant 1 : index
    %c0_12 = arith.constant 0 : index
    %c0_13 = arith.constant 0 : index
    %13 = vector.load %arg3[%c1_11, %c0_12, %c0_13] : memref<5x24x1xf32, #tpu.memory_space<vmem>>, vector<1x16x1xf32>
    %14 = vector.shape_cast %13 : vector<1x16x1xf32> to vector<16x1xf32>
    %15 = vector.broadcast %14 : vector<16x1xf32> to vector<16x8xf32>
    %16 = arith.addf %12, %15 : vector<16x8xf32>
    %cst_14 = arith.constant 0.000000e+00 : f32
    %17 = vector.broadcast %cst_14 : f32 to vector<16x8xf32>
    %18 = arith.maximumf %16, %17 : vector<16x8xf32>
    %c2 = arith.constant 2 : index
    %c0_15 = arith.constant 0 : index
    %c0_16 = arith.constant 0 : index
    %19 = vector.load %arg2[%c2, %c0_15, %c0_16] : memref<5x24x24xf32, #tpu.memory_space<vmem>>, vector<1x16x16xf32>
    %20 = vector.shape_cast %19 : vector<1x16x16xf32> to vector<16x16xf32>
    %cst_17 = arith.constant dense<0.000000e+00> : vector<16x8xf32>
    %21 = tpu.matmul %20, %18, %cst_17 {dimension_numbers = #tpu.dot_dimension_numbers<[1], [0], [0], [1], [0, 0, 1, 1], [], []>, precision = #tpu.contract_precision<fp32>} : vector<16x16xf32>, vector<16x8xf32>, vector<16x8xf32> -> vector<16x8xf32>
    %c2_18 = arith.constant 2 : index
    %c0_19 = arith.constant 0 : index
    %c0_20 = arith.constant 0 : index
    %22 = vector.load %arg3[%c2_18, %c0_19, %c0_20] : memref<5x24x1xf32, #tpu.memory_space<vmem>>, vector<1x16x1xf32>
    %23 = vector.shape_cast %22 : vector<1x16x1xf32> to vector<16x1xf32>
    %24 = vector.broadcast %23 : vector<16x1xf32> to vector<16x8xf32>
    %25 = arith.addf %21, %24 : vector<16x8xf32>
    %cst_21 = arith.constant 0.000000e+00 : f32
    %26 = vector.broadcast %cst_21 : f32 to vector<16x8xf32>
    %27 = arith.maximumf %25, %26 : vector<16x8xf32>
    %c3 = arith.constant 3 : index
    %c0_22 = arith.constant 0 : index
    %c0_23 = arith.constant 0 : index
    %28 = vector.load %arg2[%c3, %c0_22, %c0_23] : memref<5x24x24xf32, #tpu.memory_space<vmem>>, vector<1x24x16xf32>
    %29 = vector.shape_cast %28 : vector<1x24x16xf32> to vector<24x16xf32>
    %cst_24 = arith.constant dense<0.000000e+00> : vector<24x8xf32>
    %30 = tpu.matmul %29, %27, %cst_24 {dimension_numbers = #tpu.dot_dimension_numbers<[1], [0], [0], [1], [0, 0, 1, 1], [], []>, precision = #tpu.contract_precision<fp32>} : vector<24x16xf32>, vector<16x8xf32>, vector<24x8xf32> -> vector<24x8xf32>
    %c3_25 = arith.constant 3 : index
    %c0_26 = arith.constant 0 : index
    %c0_27 = arith.constant 0 : index
    %31 = vector.load %arg3[%c3_25, %c0_26, %c0_27] : memref<5x24x1xf32, #tpu.memory_space<vmem>>, vector<1x24x1xf32>
    %32 = vector.shape_cast %31 : vector<1x24x1xf32> to vector<24x1xf32>
    %33 = vector.broadcast %32 : vector<24x1xf32> to vector<24x8xf32>
    %34 = arith.addf %30, %33 : vector<24x8xf32>
    %cst_28 = arith.constant 0.000000e+00 : f32
    %35 = vector.broadcast %cst_28 : f32 to vector<24x8xf32>
    %36 = arith.maximumf %34, %35 : vector<24x8xf32>
    %c4 = arith.constant 4 : index
    %c0_29 = arith.constant 0 : index
    %c0_30 = arith.constant 0 : index
    %37 = vector.load %arg2[%c4, %c0_29, %c0_30] : memref<5x24x24xf32, #tpu.memory_space<vmem>>, vector<1x16x24xf32>
    %38 = vector.shape_cast %37 : vector<1x16x24xf32> to vector<16x24xf32>
    %cst_31 = arith.constant dense<0.000000e+00> : vector<16x8xf32>
    %39 = tpu.matmul %38, %36, %cst_31 {dimension_numbers = #tpu.dot_dimension_numbers<[1], [0], [0], [1], [0, 0, 1, 1], [], []>, precision = #tpu.contract_precision<fp32>} : vector<16x24xf32>, vector<24x8xf32>, vector<16x8xf32> -> vector<16x8xf32>
    %c4_32 = arith.constant 4 : index
    %c0_33 = arith.constant 0 : index
    %c0_34 = arith.constant 0 : index
    %40 = vector.load %arg3[%c4_32, %c0_33, %c0_34] : memref<5x24x1xf32, #tpu.memory_space<vmem>>, vector<1x16x1xf32>
    %41 = vector.shape_cast %40 : vector<1x16x1xf32> to vector<16x1xf32>
    %42 = vector.broadcast %41 : vector<16x1xf32> to vector<16x8xf32>
    %43 = arith.addf %39, %42 : vector<16x8xf32>
    %44 = vector.extract_strided_slice %43 {offsets = [0, 0], sizes = [13, 8], strides = [1, 1]} : vector<16x8xf32> to vector<13x8xf32>
    %c0_35 = arith.constant 0 : index
    %c0_36 = arith.constant 0 : index
    %45 = vector.load %arg4[%c0_35, %c0_36] : memref<13x8xf32, #tpu.memory_space<vmem>>, vector<13x8xf32>
    tpu.vector_store %arg4[%c0_35, %c0_36], %44 {strides = array<i32>} : memref<13x8xf32, #tpu.memory_space<vmem>>, vector<13x8xf32>,
    return
  }
  func.func @transform_0(%arg0: i32) -> (i32, i32) {
    %c0_i32 = arith.constant 0 : i32
    %c0_i32_0 = arith.constant 0 : i32
    return %c0_i32, %arg0 : i32, i32
  }
  func.func @transform_1(%arg0: i32) -> (i32, i32, i32) {
    %c0_i32 = arith.constant 0 : i32
    %c0_i32_0 = arith.constant 0 : i32
    %c0_i32_1 = arith.constant 0 : i32
    %c0_i32_2 = arith.constant 0 : i32
    return %c0_i32, %c0_i32_0, %c0_i32_1 : i32, i32, i32
  }
  func.func @transform_2(%arg0: i32) -> (i32, i32, i32) {
    %c0_i32 = arith.constant 0 : i32
    %c0_i32_0 = arith.constant 0 : i32
    %c0_i32_1 = arith.constant 0 : i32
    %c0_i32_2 = arith.constant 0 : i32
    return %c0_i32, %c0_i32_0, %c0_i32_1 : i32, i32, i32
  }
  func.func @transform_3(%arg0: i32) -> (i32, i32) {
    %c0_i32 = arith.constant 0 : i32
    %c0_i32_0 = arith.constant 0 : i32
    return %c0_i32, %arg0 : i32, i32
  }
}

</mosaic_0001>

<llo_original>
// kernel: boston_housing_ae.1
$region0: #{boston_housing_ae.1}
  #allocation0 [shape = 'u32[]', space=smem, size = 0x4, offset = 0x4, fixed_abs, tag = 'smem constant byte address 0x4 - core index']
  #allocation1 [shape = 'u32[144,128]{1,0:T(1,128)}', space=vmem, size = 0x12000, scoped, tag = 'internal scratch']
  %s0 = inlined_call_operand.vmem [shape: f32[13,8], index: 0, kind: input, shape index: {}]
  %s1 = inlined_call_operand.vmem [shape: f32[5,24,24], index: 1, kind: input, shape index: {}]
  %s2 = inlined_call_operand.vmem [shape: f32[5,24,1], index: 2, kind: input, shape index: {}]
  %s3 = inlined_call_operand.vmem [shape: f32[13,8], index: 3, kind: output, shape index: {}]
  %s4 = sld [smem:[#allocation0]]
  $region22: #{boston_housing_ae.1} parent=0
    _
  %s6 = ssub.s32 1, %s4
  %s7 = scalar_select 0, %s6, %s4
  // Predicated region
  $region2: #{boston_housing_ae.1} parent=0 // pred_check
    _
  $region3: #{boston_housing_ae.1} parent=0 // pred_check_branch
    %9 = sbr.rel (0) target = $region5
  $region4: #{boston_housing_ae.1} parent=0 // pred_region
    _
  $region5: #{boston_housing_ae.1} parent=0 // pred_fallthru
    _
  // Predicated region
  $region6: #{boston_housing_ae.1} parent=0 // pred_check
    _
  $region7: #{boston_housing_ae.1} parent=0 // pred_check_branch
    %11 = sbr.rel (0) target = $region9
  $region8: #{boston_housing_ae.1} parent=0 // pred_region
    _
  $region9: #{boston_housing_ae.1} parent=0 // pred_fallthru
    _
  // Predicated region
  $region10: #{boston_housing_ae.1} parent=0 // pred_check
    _
  $region11: #{boston_housing_ae.1} parent=0 // pred_check_branch
    %13 = sbr.rel (0) target = $region13
  $region12: #{boston_housing_ae.1} parent=0 // pred_region
    _
  $region13: #{boston_housing_ae.1} parent=0 // pred_fallthru
    _
  %v14 = vld [vmem:[%s0] sm:$0xff]
  %v15 = vld [vmem:[%s0 + $0x8] sm:$0x1f]
  %v16 = vld [vmem:[%s1] sm:$0xff]
  %v17 = vld [vmem:[%s1 + $0x8] sm:$0xff]
  %v18 = vld [vmem:[%s1 + $0x10] sm:$0xff]
  %v19 = vld [vmem:[%s2] sm:$0xff]
  %v20 = vld [vmem:[%s2 + $0x8] sm:$0xff]
  %v21 = vld [vmem:[%s2 + $0x10] sm:$0xff]
  %23 = vset.pattern.permute.xlu0 0
  %24 = vperm.xlu0 %23, %v19
  %v25 = vpop.permute.xlu0 %24
  %28 = vset.pattern.permute.xlu0 0
  %29 = vperm.xlu0 %28, %v20
  %v30 = vpop.permute.xlu0 %29
  %33 = vset.pattern.permute.xlu0 0
  %34 = vperm.xlu0 %33, %v21
  %v35 = vpop.permute.xlu0 %34
  %vm37 = vcmask 105472
  %v39 = vsel %vm37, %v16, 0
  %v42 = vsel %vm37, %v17, 0
  %v45 = vsel %vm37, %v18, 0
  %vm47 = vcmask 1044480
  %v49 = vsel %vm47, %v15, 0
  %51 = vmatprep.subr.mxu0 0.0
  %v52 = vand.u32 %v14, 4294901760
  %53 = vmatpush1.msra.mxu0 %v52
  %54 = vmatprep.subr.mxu0 0.0
  %v55 = vand.u32 %v49, 4294901760
  %56 = vmatpush1.msra.mxu0 %v55
  %57 = vmatprep.subr.mxu0 0.0
  %58 = vmatpush1.msra.mxu0 0.0
  %59 = vmatprep.subr.mxu0 0.0
  %60 = vmatpush1.msra.mxu0 0.0
  %61 = vmatprep.subr.mxu0 0.0
  %62 = vmatpush1.msra.mxu0 0.0
  %63 = vmatprep.subr.mxu0 0.0
  %64 = vmatpush1.msra.mxu0 0.0
  %65 = vmatprep.subr.mxu0 0.0
  %66 = vmatpush1.msra.mxu0 0.0
  %67 = vmatprep.subr.mxu0 0.0
  %68 = vmatpush1.msra.mxu0 0.0
  %69 = vmatprep.subr.mxu0 0.0
  %70 = vmatpush1.msra.mxu0 0.0
  %71 = vmatprep.subr.mxu0 0.0
  %72 = vmatpush1.msra.mxu0 0.0
  %73 = vmatprep.subr.mxu0 0.0
  %74 = vmatpush1.msra.mxu0 0.0
  %75 = vmatprep.subr.mxu0 0.0
  %76 = vmatpush1.msra.mxu0 0.0
  %77 = vmatprep.subr.mxu0 0.0
  %78 = vmatpush1.msra.mxu0 0.0
  %79 = vmatprep.subr.mxu0 0.0
  %80 = vmatpush1.msra.mxu0 0.0
  %81 = vmatprep.subr.mxu0 0.0
  %82 = vmatpush1.msra.mxu0 0.0
  %83 = vmatprep.subr.mxu0 0.0
  %84 = vmatpush1.msra.mxu0 0.0
  %85 = vmatprep.subr.mxu0 0.0
  %86 = vmatpush1.msra.mxu0 0.0
  %87 = vmatprep.subr.mxu0 0.0
  %88 = vmatpush1.msra.mxu0 0.0
  %89 = vmatprep.subr.mxu0 0.0
  %90 = vmatpush1.msra.mxu0 0.0
  %91 = vmatprep.subr.mxu0 0.0
  %92 = vmatpush1.msra.mxu0 0.0
  %93 = vmatprep.subr.mxu0 0.0
  %94 = vmatpush1.msra.mxu0 0.0
  %95 = vmatprep.subr.mxu0 0.0
  %96 = vmatpush1.msra.mxu0 0.0
  %97 = vmatprep.subr.mxu0 0.0
  %98 = vmatpush1.msra.mxu0 0.0
  %99 = vmatprep.subr.mxu0 0.0
  %100 = vmatpush1.msra.mxu0 0.0
  %101 = vmatprep.subr.mxu0 0.0
  %102 = vmatpush1.msra.mxu0 0.0
  %103 = vmatprep.subr.mxu0 0.0
  %104 = vmatpush1.msra.mxu0 0.0
  %105 = vmatprep.subr.mxu0 0.0
  %106 = vmatpush1.msra.mxu0 0.0
  %107 = vmatprep.subr.mxu0 0.0
  %108 = vmatpush1.msra.mxu0 0.0
  %109 = vmatprep.subr.mxu0 0.0
  %110 = vmatpush1.msra.mxu0 0.0
  %111 = vmatprep.subr.mxu0 0.0
  %112 = vmatpush1.msra.mxu0 0.0
  %113 = vmatprep.subr.mxu0 0.0
  %114 = vmatpush1.msra.mxu0 0.0
  %115 = vmatprep.subr.mxu0 0.0
  %116 = vmatpush1.msra.mxu0 0.0
  %117 = vmatprep.mubr.f32.mxu0 0.0
  %v118 = vand.u32 %v39, 4294901760
  %v119 = vsub.f32 %v39, %v118
  %v120 = vand.u32 %v119, 4294901760
  %v121 = vsub.f32 %v119, %v120
  %v122 = vand.u32 %v121, 4294901760
  %123 = vmatmul.mubr.f32.gmra.mrb[0].mxu0 %v122
  %v124 = vpop.f32.mrb[0].mxu0
  %v125 = vadd.f32 %v25, %v124
  %v126 = vpop.f32.mrb[0].mxu0
  %127 = vmatprep.mubr.f32.mxu0 0.0
  %v128 = vand.u32 %v42, 4294901760
  %v129 = vsub.f32 %v42, %v128
  %v130 = vand.u32 %v129, 4294901760
  %v131 = vsub.f32 %v129, %v130
  %v132 = vand.u32 %v131, 4294901760
  %133 = vmatmul.mubr.f32.gmra.mrb[0].mxu0 %v132
  %v134 = vpop.f32.mrb[0].mxu0
  %v135 = vadd.f32 %v30, %v134
  %v136 = vpop.f32.mrb[0].mxu0
  %137 = vmatprep.mubr.f32.mxu0 0.0
  %v138 = vand.u32 %v45, 4294901760
  %v139 = vsub.f32 %v45, %v138
  %v140 = vand.u32 %v139, 4294901760
  %v141 = vsub.f32 %v139, %v140
  %v142 = vand.u32 %v141, 4294901760
  %143 = vmatmul.mubr.f32.gmra.mrb[0].mxu0 %v142
  %v144 = vpop.f32.mrb[0].mxu0
  %v145 = vadd.f32 %v35, %v144
  %v146 = vpop.f32.mrb[0].mxu0
  %147 = vdwg.mxu0
  %148 = vmatprep.subr.mxu0 0.0
  %v149 = vand.u32 %v14, 4294901760
  %v150 = vsub.f32 %v14, %v149
  %v151 = vand.u32 %v150, 4294901760
  %v152 = vsub.f32 %v150, %v151
  %v153 = vand.u32 %v152, 4294901760
  %154 = vmatpush1.msra.mxu0 %v153
  %155 = vmatprep.subr.mxu0 0.0
  %v156 = vand.u32 %v49, 4294901760
  %v157 = vsub.f32 %v49, %v156
  %v158 = vand.u32 %v157, 4294901760
  %v159 = vsub.f32 %v157, %v158
  %v160 = vand.u32 %v159, 4294901760
  %161 = vmatpush1.msra.mxu0 %v160
  %162 = vmatprep.subr.mxu0 0.0
  %163 = vmatpush1.msra.mxu0 0.0
  %164 = vmatprep.subr.mxu0 0.0
  %165 = vmatpush1.msra.mxu0 0.0
  %166 = vmatprep.subr.mxu0 0.0
  %167 = vmatpush1.msra.mxu0 0.0
  %168 = vmatprep.subr.mxu0 0.0
  %169 = vmatpush1.msra.mxu0 0.0
  %170 = vmatprep.subr.mxu0 0.0
  %171 = vmatpush1.msra.mxu0 0.0
  %172 = vmatprep.subr.mxu0 0.0
  %173 = vmatpush1.msra.mxu0 0.0
  %174 = vmatprep.subr.mxu0 0.0
  %175 = vmatpush1.msra.mxu0 0.0
  %176 = vmatprep.subr.mxu0 0.0
  %177 = vmatpush1.msra.mxu0 0.0
  %178 = vmatprep.subr.mxu0 0.0
  %179 = vmatpush1.msra.mxu0 0.0
  %180 = vmatprep.subr.mxu0 0.0
  %181 = vmatpush1.msra.mxu0 0.0
  %182 = vmatprep.subr.mxu0 0.0
  %183 = vmatpush1.msra.mxu0 0.0
  %184 = vmatprep.subr.mxu0 0.0
  %185 = vmatpush1.msra.mxu0 0.0
  %186 = vmatprep.subr.mxu0 0.0
  %187 = vmatpush1.msra.mxu0 0.0
  %188 = vmatprep.subr.mxu0 0.0
  %189 = vmatpush1.msra.mxu0 0.0
  %190 = vmatprep.subr.mxu0 0.0
  %191 = vmatpush1.msra.mxu0 0.0
  %192 = vmatprep.subr.mxu0 0.0
  %193 = vmatpush1.msra.mxu0 0.0
  %194 = vmatprep.subr.mxu0 0.0
  %195 = vmatpush1.msra.mxu0 0.0
  %196 = vmatprep.subr.mxu0 0.0
  %197 = vmatpush1.msra.mxu0 0.0
  %198 = vmatprep.subr.mxu0 0.0
  %199 = vmatpush1.msra.mxu0 0.0
  %200 = vmatprep.subr.mxu0 0.0
  %201 = vmatpush1.msra.mxu0 0.0
  %202 = vmatprep.subr.mxu0 0.0
  %203 = vmatpush1.msra.mxu0 0.0
  %204 = vmatprep.subr.mxu0 0.0
  %205 = vmatpush1.msra.mxu0 0.0
  %206 = vmatprep.subr.mxu0 0.0
  %207 = vmatpush1.msra.mxu0 0.0
  %208 = vmatprep.subr.mxu0 0.0
  %209 = vmatpush1.msra.mxu0 0.0
  %210 = vmatprep.subr.mxu0 0.0
  %211 = vmatpush1.msra.mxu0 0.0
  %212 = vmatprep.subr.mxu0 0.0
  %213 = vmatpush1.msra.mxu0 0.0
  %214 = vmatprep.subr.mxu0 0.0
  %215 = vmatpush1.msra.mxu0 0.0
  %216 = vmatprep.subr.mxu0 0.0
  %217 = vmatpush1.msra.mxu0 0.0
  %218 = vmatprep.subr.mxu0 0.0
  %219 = vmatpush1.msra.mxu0 0.0
  %220 = vmatprep.subr.mxu0 0.0
  %221 = vmatpush1.msra.mxu0 0.0
  %222 = vmatprep.mubr.f32.mxu0 0.0
  %v223 = vand.u32 %v39, 4294901760
  %224 = vmatmul.mubr.f32.gmra.mrb[0].mxu0 %v223
  %v225 = vpop.f32.mrb[0].mxu0
  %v226 = vadd.f32 %v125, %v225
  %v227 = vpop.f32.mrb[0].mxu0
  %228 = vmatprep.mubr.f32.mxu0 0.0
  %v229 = vand.u32 %v42, 4294901760
  %230 = vmatmul.mubr.f32.gmra.mrb[0].mxu0 %v229
  %v231 = vpop.f32.mrb[0].mxu0
  %v232 = vadd.f32 %v135, %v231
  %v233 = vpop.f32.mrb[0].mxu0
  %234 = vmatprep.mubr.f32.mxu0 0.0
  %v235 = vand.u32 %v45, 4294901760
  %236 = vmatmul.mubr.f32.gmra.mrb[0].mxu0 %v235
  %v237 = vpop.f32.mrb[0].mxu0
  %v238 = vadd.f32 %v145, %v237
  %v239 = vpop.f32.mrb[0].mxu0
  %240 = vdwg.mxu0
  %241 = vmatprep.subr.mxu0 0.0
  %v242 = vand.u32 %v14, 4294901760
  %v243 = vsub.f32 %v14, %v242
  %244 = vmatpush1.msra.mxu0 %v243
  %245 = vmatprep.subr.mxu0 0.0
  %v246 = vand.u32 %v49, 4294901760
  %v247 = vsub.f32 %v49, %v246
  %248 = vmatpush1.msra.mxu0 %v247
  %249 = vmatprep.subr.mxu0 0.0
  %250 = vmatpush1.msra.mxu0 0.0
  %251 = vmatprep.subr.mxu0 0.0
  %252 = vmatpush1.msra.mxu0 0.0
  %253 = vmatprep.subr.mxu0 0.0
  %254 = vmatpush1.msra.mxu0 0.0
  %255 = vmatprep.subr.mxu0 0.0
  %256 = vmatpush1.msra.mxu0 0.0
  %257 = vmatprep.subr.mxu0 0.0
  %258 = vmatpush1.msra.mxu0 0.0
  %259 = vmatprep.subr.mxu0 0.0
  %260 = vmatpush1.msra.mxu0 0.0
  %261 = vmatprep.subr.mxu0 0.0
  %262 = vmatpush1.msra.mxu0 0.0
  %263 = vmatprep.subr.mxu0 0.0
  %264 = vmatpush1.msra.mxu0 0.0
  %265 = vmatprep.subr.mxu0 0.0
  %266 = vmatpush1.msra.mxu0 0.0
  %267 = vmatprep.subr.mxu0 0.0
  %268 = vmatpush1.msra.mxu0 0.0
  %269 = vmatprep.subr.mxu0 0.0
  %270 = vmatpush1.msra.mxu0 0.0
  %271 = vmatprep.subr.mxu0 0.0
  %272 = vmatpush1.msra.mxu0 0.0
  %273 = vmatprep.subr.mxu0 0.0
  %274 = vmatpush1.msra.mxu0 0.0
  %275 = vmatprep.subr.mxu0 0.0
  %276 = vmatpush1.msra.mxu0 0.0
  %277 = vmatprep.subr.mxu0 0.0
  %278 = vmatpush1.msra.mxu0 0.0
  %279 = vmatprep.subr.mxu0 0.0
  %280 = vmatpush1.msra.mxu0 0.0
  %281 = vmatprep.subr.mxu0 0.0
  %282 = vmatpush1.msra.mxu0 0.0
  %283 = vmatprep.subr.mxu0 0.0
  %284 = vmatpush1.msra.mxu0 0.0
  %285 = vmatprep.subr.mxu0 0.0
  %286 = vmatpush1.msra.mxu0 0.0
  %287 = vmatprep.subr.mxu0 0.0
  %288 = vmatpush1.msra.mxu0 0.0
  %289 = vmatprep.subr.mxu0 0.0
  %290 = vmatpush1.msra.mxu0 0.0
  %291 = vmatprep.subr.mxu0 0.0
  %292 = vmatpush1.msra.mxu0 0.0
  %293 = vmatprep.subr.mxu0 0.0
  %294 = vmatpush1.msra.mxu0 0.0
  %295 = vmatprep.subr.mxu0 0.0
  %296 = vmatpush1.msra.mxu0 0.0
  %297 = vmatprep.subr.mxu0 0.0
  %298 = vmatpush1.msra.mxu0 0.0
  %299 = vmatprep.subr.mxu0 0.0
  %300 = vmatpush1.msra.mxu0 0.0
  %301 = vmatprep.subr.mxu0 0.0
  %302 = vmatpush1.msra.mxu0 0.0
  %303 = vmatprep.subr.mxu0 0.0
  %304 = vmatpush1.msra.mxu0 0.0
  %305 = vmatprep.subr.mxu0 0.0
  %306 = vmatpush1.msra.mxu0 0.0
  %307 = vmatprep.subr.mxu0 0.0
  %308 = vmatpush1.msra.mxu0 0.0
  %309 = vmatprep.mubr.f32.mxu0 0.0
  %v310 = vand.u32 %v39, 4294901760
  %v311 = vsub.f32 %v39, %v310
  %312 = vmatmul.mubr.f32.gmra.mrb[0].mxu0 %v311
  %v313 = vpop.f32.mrb[0].mxu0
  %v314 = vadd.f32 %v226, %v313
  %v315 = vpop.f32.mrb[0].mxu0
  %316 = vmatprep.mubr.f32.mxu0 0.0
  %v317 = vand.u32 %v42, 4294901760
  %v318 = vsub.f32 %v42, %v317
  %319 = vmatmul.mubr.f32.gmra.mrb[0].mxu0 %v318
  %v320 = vpop.f32.mrb[0].mxu0
  %v321 = vadd.f32 %v232, %v320
  %v322 = vpop.f32.mrb[0].mxu0
  %323 = vmatprep.mubr.f32.mxu0 0.0
  %v324 = vand.u32 %v45, 4294901760
  %v325 = vsub.f32 %v45, %v324
  %326 = vmatmul.mubr.f32.gmra.mrb[0].mxu0 %v325
  %v327 = vpop.f32.mrb[0].mxu0
  %v328 = vadd.f32 %v238, %v327
  %v329 = vpop.f32.mrb[0].mxu0
  %330 = vdwg.mxu0
  %331 = vmatprep.subr.mxu0 0.0
  %v332 = vand.u32 %v14, 4294901760
  %333 = vmatpush1.msra.mxu0 %v332
  %334 = vmatprep.subr.mxu0 0.0
  %v335 = vand.u32 %v49, 4294901760
  %336 = vmatpush1.msra.mxu0 %v335
  %337 = vmatprep.subr.mxu0 0.0
  %338 = vmatpush1.msra.mxu0 0.0
  %339 = vmatprep.subr.mxu0 0.0
  %340 = vmatpush1.msra.mxu0 0.0
  %341 = vmatprep.subr.mxu0 0.0
  %342 = vmatpush1.msra.mxu0 0.0
  %343 = vmatprep.subr.mxu0 0.0
  %344 = vmatpush1.msra.mxu0 0.0
  %345 = vmatprep.subr.mxu0 0.0
  %346 = vmatpush1.msra.mxu0 0.0
  %347 = vmatprep.subr.mxu0 0.0
  %348 = vmatpush1.msra.mxu0 0.0
  %349 = vmatprep.subr.mxu0 0.0
  %350 = vmatpush1.msra.mxu0 0.0
  %351 = vmatprep.subr.mxu0 0.0
  %352 = vmatpush1.msra.mxu0 0.0
  %353 = vmatprep.subr.mxu0 0.0
  %354 = vmatpush1.msra.mxu0 0.0
  %355 = vmatprep.subr.mxu0 0.0
  %356 = vmatpush1.msra.mxu0 0.0
  %357 = vmatprep.subr.mxu0 0.0
  %358 = vmatpush1.msra.mxu0 0.0
  %359 = vmatprep.subr.mxu0 0.0
  %360 = vmatpush1.msra.mxu0 0.0
  %361 = vmatprep.subr.mxu0 0.0
  %362 = vmatpush1.msra.mxu0 0.0
  %363 = vmatprep.subr.mxu0 0.0
  %364 = vmatpush1.msra.mxu0 0.0
  %365 = vmatprep.subr.mxu0 0.0
  %366 = vmatpush1.msra.mxu0 0.0
  %367 = vmatprep.subr.mxu0 0.0
  %368 = vmatpush1.msra.mxu0 0.0
  %369 = vmatprep.subr.mxu0 0.0
  %370 = vmatpush1.msra.mxu0 0.0
  %371 = vmatprep.subr.mxu0 0.0
  %372 = vmatpush1.msra.mxu0 0.0
  %373 = vmatprep.subr.mxu0 0.0
  %374 = vmatpush1.msra.mxu0 0.0
  %375 = vmatprep.subr.mxu0 0.0
  %376 = vmatpush1.msra.mxu0 0.0
  %377 = vmatprep.subr.mxu0 0.0
  %378 = vmatpush1.msra.mxu0 0.0
  %379 = vmatprep.subr.mxu0 0.0
  %380 = vmatpush1.msra.mxu0 0.0
  %381 = vmatprep.subr.mxu0 0.0
  %382 = vmatpush1.msra.mxu0 0.0
  %383 = vmatprep.subr.mxu0 0.0
  %384 = vmatpush1.msra.mxu0 0.0
  %385 = vmatprep.subr.mxu0 0.0
  %386 = vmatpush1.msra.mxu0 0.0
  %387 = vmatprep.subr.mxu0 0.0
  %388 = vmatpush1.msra.mxu0 0.0
  %389 = vmatprep.subr.mxu0 0.0
  %390 = vmatpush1.msra.mxu0 0.0
  %391 = vmatprep.subr.mxu0 0.0
  %392 = vmatpush1.msra.mxu0 0.0
  %393 = vmatprep.subr.mxu0 0.0
  %394 = vmatpush1.msra.mxu0 0.0
  %395 = vmatprep.subr.mxu0 0.0
  %396 = vmatpush1.msra.mxu0 0.0
  %397 = vmatprep.mubr.f32.mxu0 0.0
  %v398 = vand.u32 %v39, 4294901760
  %v399 = vsub.f32 %v39, %v398
  %v400 = vand.u32 %v399, 4294901760
  %401 = vmatmul.mubr.f32.gmra.mrb[0].mxu0 %v400
  %v402 = vpop.f32.mrb[0].mxu0
  %v403 = vadd.f32 %v314, %v402
  %v404 = vpop.f32.mrb[0].mxu0
  %405 = vmatprep.mubr.f32.mxu0 0.0
  %v406 = vand.u32 %v42, 4294901760
  %v407 = vsub.f32 %v42, %v406
  %v408 = vand.u32 %v407, 4294901760
  %409 = vmatmul.mubr.f32.gmra.mrb[0].mxu0 %v408
  %v410 = vpop.f32.mrb[0].mxu0
  %v411 = vadd.f32 %v321, %v410
  %v412 = vpop.f32.mrb[0].mxu0
  %413 = vmatprep.mubr.f32.mxu0 0.0
  %v414 = vand.u32 %v45, 4294901760
  %v415 = vsub.f32 %v45, %v414
  %v416 = vand.u32 %v415, 4294901760
  %417 = vmatmul.mubr.f32.gmra.mrb[0].mxu0 %v416
  %v418 = vpop.f32.mrb[0].mxu0
  %v419 = vadd.f32 %v328, %v418
  %v420 = vpop.f32.mrb[0].mxu0
  %421 = vdwg.mxu0
  %422 = vmatprep.subr.mxu0 0.0
  %v423 = vand.u32 %v14, 4294901760
  %v424 = vsub.f32 %v14, %v423
  %v425 = vand.u32 %v424, 4294901760
  %426 = vmatpush1.msra.mxu0 %v425
  %427 = vmatprep.subr.mxu0 0.0
  %v428 = vand.u32 %v49, 4294901760
  %v429 = vsub.f32 %v49, %v428
  %v430 = vand.u32 %v429, 4294901760
  %431 = vmatpush1.msra.mxu0 %v430
  %432 = vmatprep.subr.mxu0 0.0
  %433 = vmatpush1.msra.mxu0 0.0
  %434 = vmatprep.subr.mxu0 0.0
  %435 = vmatpush1.msra.mxu0 0.0
  %436 = vmatprep.subr.mxu0 0.0
  %437 = vmatpush1.msra.mxu0 0.0
  %438 = vmatprep.subr.mxu0 0.0
  %439 = vmatpush1.msra.mxu0 0.0
  %440 = vmatprep.subr.mxu0 0.0
  %441 = vmatpush1.msra.mxu0 0.0
  %442 = vmatprep.subr.mxu0 0.0
  %443 = vmatpush1.msra.mxu0 0.0
  %444 = vmatprep.subr.mxu0 0.0
  %445 = vmatpush1.msra.mxu0 0.0
  %446 = vmatprep.subr.mxu0 0.0
  %447 = vmatpush1.msra.mxu0 0.0
  %448 = vmatprep.subr.mxu0 0.0
  %449 = vmatpush1.msra.mxu0 0.0
  %450 = vmatprep.subr.mxu0 0.0
  %451 = vmatpush1.msra.mxu0 0.0
  %452 = vmatprep.subr.mxu0 0.0
  %453 = vmatpush1.msra.mxu0 0.0
  %454 = vmatprep.subr.mxu0 0.0
  %455 = vmatpush1.msra.mxu0 0.0
  %456 = vmatprep.subr.mxu0 0.0
  %457 = vmatpush1.msra.mxu0 0.0
  %458 = vmatprep.subr.mxu0 0.0
  %459 = vmatpush1.msra.mxu0 0.0
  %460 = vmatprep.subr.mxu0 0.0
  %461 = vmatpush1.msra.mxu0 0.0
  %462 = vmatprep.subr.mxu0 0.0
  %463 = vmatpush1.msra.mxu0 0.0
  %464 = vmatprep.subr.mxu0 0.0
  %465 = vmatpush1.msra.mxu0 0.0
  %466 = vmatprep.subr.mxu0 0.0
  %467 = vmatpush1.msra.mxu0 0.0
  %468 = vmatprep.subr.mxu0 0.0
  %469 = vmatpush1.msra.mxu0 0.0
  %470 = vmatprep.subr.mxu0 0.0
  %471 = vmatpush1.msra.mxu0 0.0
  %472 = vmatprep.subr.mxu0 0.0
  %473 = vmatpush1.msra.mxu0 0.0
  %474 = vmatprep.subr.mxu0 0.0
  %475 = vmatpush1.msra.mxu0 0.0
  %476 = vmatprep.subr.mxu0 0.0
  %477 = vmatpush1.msra.mxu0 0.0
  %478 = vmatprep.subr.mxu0 0.0
  %479 = vmatpush1.msra.mxu0 0.0
  %480 = vmatprep.subr.mxu0 0.0
  %481 = vmatpush1.msra.mxu0 0.0
  %482 = vmatprep.subr.mxu0 0.0
  %483 = vmatpush1.msra.mxu0 0.0
  %484 = vmatprep.subr.mxu0 0.0
  %485 = vmatpush1.msra.mxu0 0.0
  %486 = vmatprep.subr.mxu0 0.0
  %487 = vmatpush1.msra.mxu0 0.0
  %488 = vmatprep.subr.mxu0 0.0
  %489 = vmatpush1.msra.mxu0 0.0
  %490 = vmatprep.subr.mxu0 0.0
  %491 = vmatpush1.msra.mxu0 0.0
  %492 = vmatprep.mubr.f32.mxu0 0.0
  %v493 = vand.u32 %v39, 4294901760
  %494 = vmatmul.mubr.f32.gmra.mrb[0].mxu0 %v493
  %v495 = vpop.f32.mrb[0].mxu0
  %v496 = vadd.f32 %v403, %v495
  %v497 = vpop.f32.mrb[0].mxu0
  %498 = vmatprep.mubr.f32.mxu0 0.0
  %v499 = vand.u32 %v42, 4294901760
  %500 = vmatmul.mubr.f32.gmra.mrb[0].mxu0 %v499
  %v501 = vpop.f32.mrb[0].mxu0
  %v502 = vadd.f32 %v411, %v501
  %v503 = vpop.f32.mrb[0].mxu0
  %504 = vmatprep.mubr.f32.mxu0 0.0
  %v505 = vand.u32 %v45, 4294901760
  %506 = vmatmul.mubr.f32.gmra.mrb[0].mxu0 %v505
  %v507 = vpop.f32.mrb[0].mxu0
  %v508 = vadd.f32 %v419, %v507
  %v509 = vpop.f32.mrb[0].mxu0
  %510 = vdwg.mxu0
  %511 = vmatprep.subr.mxu0 0.0
  %v512 = vand.u32 %v14, 4294901760
  %513 = vmatpush1.msra.mxu0 %v512
  %514 = vmatprep.subr.mxu0 0.0
  %v515 = vand.u32 %v49, 4294901760
  %516 = vmatpush1.msra.mxu0 %v515
  %517 = vmatprep.subr.mxu0 0.0
  %518 = vmatpush1.msra.mxu0 0.0
  %519 = vmatprep.subr.mxu0 0.0
  %520 = vmatpush1.msra.mxu0 0.0
  %521 = vmatprep.subr.mxu0 0.0
  %522 = vmatpush1.msra.mxu0 0.0
  %523 = vmatprep.subr.mxu0 0.0
  %524 = vmatpush1.msra.mxu0 0.0
  %525 = vmatprep.subr.mxu0 0.0
  %526 = vmatpush1.msra.mxu0 0.0
  %527 = vmatprep.subr.mxu0 0.0
  %528 = vmatpush1.msra.mxu0 0.0
  %529 = vmatprep.subr.mxu0 0.0
  %530 = vmatpush1.msra.mxu0 0.0
  %531 = vmatprep.subr.mxu0 0.0
  %532 = vmatpush1.msra.mxu0 0.0
  %533 = vmatprep.subr.mxu0 0.0
  %534 = vmatpush1.msra.mxu0 0.0
  %535 = vmatprep.subr.mxu0 0.0
  %536 = vmatpush1.msra.mxu0 0.0
  %537 = vmatprep.subr.mxu0 0.0
  %538 = vmatpush1.msra.mxu0 0.0
  %539 = vmatprep.subr.mxu0 0.0
  %540 = vmatpush1.msra.mxu0 0.0
  %541 = vmatprep.subr.mxu0 0.0
  %542 = vmatpush1.msra.mxu0 0.0
  %543 = vmatprep.subr.mxu0 0.0
  %544 = vmatpush1.msra.mxu0 0.0
  %545 = vmatprep.subr.mxu0 0.0
  %546 = vmatpush1.msra.mxu0 0.0
  %547 = vmatprep.subr.mxu0 0.0
  %548 = vmatpush1.msra.mxu0 0.0
  %549 = vmatprep.subr.mxu0 0.0
  %550 = vmatpush1.msra.mxu0 0.0
  %551 = vmatprep.subr.mxu0 0.0
  %552 = vmatpush1.msra.mxu0 0.0
  %553 = vmatprep.subr.mxu0 0.0
  %554 = vmatpush1.msra.mxu0 0.0
  %555 = vmatprep.subr.mxu0 0.0
  %556 = vmatpush1.msra.mxu0 0.0
  %557 = vmatprep.subr.mxu0 0.0
  %558 = vmatpush1.msra.mxu0 0.0
  %559 = vmatprep.subr.mxu0 0.0
  %560 = vmatpush1.msra.mxu0 0.0
  %561 = vmatprep.subr.mxu0 0.0
  %562 = vmatpush1.msra.mxu0 0.0
  %563 = vmatprep.subr.mxu0 0.0
  %564 = vmatpush1.msra.mxu0 0.0
  %565 = vmatprep.subr.mxu0 0.0
  %566 = vmatpush1.msra.mxu0 0.0
  %567 = vmatprep.subr.mxu0 0.0
  %568 = vmatpush1.msra.mxu0 0.0
  %569 = vmatprep.subr.mxu0 0.0
  %570 = vmatpush1.msra.mxu0 0.0
  %571 = vmatprep.subr.mxu0 0.0
  %572 = vmatpush1.msra.mxu0 0.0
  %573 = vmatprep.subr.mxu0 0.0
  %574 = vmatpush1.msra.mxu0 0.0
  %575 = vmatprep.subr.mxu0 0.0
  %576 = vmatpush1.msra.mxu0 0.0
  %577 = vmatprep.mubr.f32.mxu0 0.0
  %v578 = vand.u32 %v39, 4294901760
  %579 = vmatmul.mubr.f32.gmra.mrb[0].mxu0 %v578
  %v580 = vpop.f32.mrb[0].mxu0
  %v581 = vadd.f32 %v496, %v580
  %v582 = vpop.f32.mrb[0].mxu0
  %583 = vmatprep.mubr.f32.mxu0 0.0
  %v584 = vand.u32 %v42, 4294901760
  %585 = vmatmul.mubr.f32.gmra.mrb[0].mxu0 %v584
  %v586 = vpop.f32.mrb[0].mxu0
  %v587 = vadd.f32 %v502, %v586
  %v588 = vpop.f32.mrb[0].mxu0
  %589 = vmatprep.mubr.f32.mxu0 0.0
  %v590 = vand.u32 %v45, 4294901760
  %591 = vmatmul.mubr.f32.gmra.mrb[0].mxu0 %v590
  %v592 = vpop.f32.mrb[0].mxu0
  %v593 = vadd.f32 %v508, %v592
  %v594 = vpop.f32.mrb[0].mxu0
  %595 = vdwg.mxu0
  %v596 = vmax.f32 %v581, 0.0
  %v597 = vmax.f32 %v587, 0.0
  %v598 = vmax.f32 %v593, 0.0
  %s599 = scalar_lea.vmem %s1, 24
  %v600 = vld [vmem:[%s599] sm:$0xff]
  %v601 = vld [vmem:[%s599 + $0x8] sm:$0xff]
  %s602 = scalar_lea.vmem %s2, 24
  %v603 = vld [vmem:[%s602] sm:$0xff]
  %v604 = vld [vmem:[%s602 + $0x8] sm:$0xff]
  %606 = vset.pattern.permute.xlu0 0
  %607 = vperm.xlu0 %606, %v603
  %v608 = vpop.permute.xlu0 %607
  %611 = vset.pattern.permute.xlu0 0
  %612 = vperm.xlu0 %611, %v604
  %v613 = vpop.permute.xlu0 %612
  %vm615 = vcmask 195584
  %v617 = vsel %vm615, %v600, 0
  %v620 = vsel %vm615, %v601, 0
  %622 = vmatprep.subr.mxu0 0.0
  %v623 = vand.u32 %v596, 4294901760
  %624 = vmatpush1.msra.mxu0 %v623
  %625 = vmatprep.subr.mxu0 0.0
  %v626 = vand.u32 %v597, 4294901760
  %627 = vmatpush1.msra.mxu0 %v626
  %628 = vmatprep.subr.mxu0 0.0
  %v629 = vand.u32 %v598, 4294901760
  %630 = vmatpush1.msra.mxu0 %v629
  %631 = vmatprep.subr.mxu0 0.0
  %632 = vmatpush1.msra.mxu0 0.0
  %633 = vmatprep.subr.mxu0 0.0
  %634 = vmatpush1.msra.mxu0 0.0
  %635 = vmatprep.subr.mxu0 0.0
  %636 = vmatpush1.msra.mxu0 0.0
  %637 = vmatprep.subr.mxu0 0.0
  %638 = vmatpush1.msra.mxu0 0.0
  %639 = vmatprep.subr.mxu0 0.0
  %640 = vmatpush1.msra.mxu0 0.0
  %641 = vmatprep.subr.mxu0 0.0
  %642 = vmatpush1.msra.mxu0 0.0
  %643 = vmatprep.subr.mxu0 0.0
  %644 = vmatpush1.msra.mxu0 0.0
  %645 = vmatprep.subr.mxu0 0.0
  %646 = vmatpush1.msra.mxu0 0.0
  %647 = vmatprep.subr.mxu0 0.0
  %648 = vmatpush1.msra.mxu0 0.0
  %649 = vmatprep.subr.mxu0 0.0
  %650 = vmatpush1.msra.mxu0 0.0
  %651 = vmatprep.subr.mxu0 0.0
  %652 = vmatpush1.msra.mxu0 0.0
  %653 = vmatprep.subr.mxu0 0.0
  %654 = vmatpush1.msra.mxu0 0.0
  %655 = vmatprep.subr.mxu0 0.0
  %656 = vmatpush1.msra.mxu0 0.0
  %657 = vmatprep.subr.mxu0 0.0
  %658 = vmatpush1.msra.mxu0 0.0
  %659 = vmatprep.subr.mxu0 0.0
  %660 = vmatpush1.msra.mxu0 0.0
  %661 = vmatprep.subr.mxu0 0.0
  %662 = vmatpush1.msra.mxu0 0.0
  %663 = vmatprep.subr.mxu0 0.0
  %664 = vmatpush1.msra.mxu0 0.0
  %665 = vmatprep.subr.mxu0 0.0
  %666 = vmatpush1.msra.mxu0 0.0
  %667 = vmatprep.subr.mxu0 0.0
  %668 = vmatpush1.msra.mxu0 0.0
  %669 = vmatprep.subr.mxu0 0.0
  %670 = vmatpush1.msra.mxu0 0.0
  %671 = vmatprep.subr.mxu0 0.0
  %672 = vmatpush1.msra.mxu0 0.0
  %673 = vmatprep.subr.mxu0 0.0
  %674 = vmatpush1.msra.mxu0 0.0
  %675 = vmatprep.subr.mxu0 0.0
  %676 = vmatpush1.msra.mxu0 0.0
  %677 = vmatprep.subr.mxu0 0.0
  %678 = vmatpush1.msra.mxu0 0.0
  %679 = vmatprep.subr.mxu0 0.0
  %680 = vmatpush1.msra.mxu0 0.0
  %681 = vmatprep.subr.mxu0 0.0
  %682 = vmatpush1.msra.mxu0 0.0
  %683 = vmatprep.subr.mxu0 0.0
  %684 = vmatpush1.msra.mxu0 0.0
  %685 = vmatprep.subr.mxu0 0.0
  %686 = vmatpush1.msra.mxu0 0.0
  %687 = vmatprep.subr.mxu0 0.0
  %688 = vmatpush1.msra.mxu0 0.0
  %689 = vmatprep.mubr.f32.mxu0 0.0
  %v690 = vand.u32 %v617, 4294901760
  %v691 = vsub.f32 %v617, %v690
  %v692 = vand.u32 %v691, 4294901760
  %v693 = vsub.f32 %v691, %v692
  %v694 = vand.u32 %v693, 4294901760
  %695 = vmatmul.mubr.f32.gmra.mrb[0].mxu0 %v694
  %v696 = vpop.f32.mrb[0].mxu0
  %v697 = vadd.f32 %v608, %v696
  %v698 = vpop.f32.mrb[0].mxu0
  %699 = vmatprep.mubr.f32.mxu0 0.0
  %v700 = vand.u32 %v620, 4294901760
  %v701 = vsub.f32 %v620, %v700
  %v702 = vand.u32 %v701, 4294901760
  %v703 = vsub.f32 %v701, %v702
  %v704 = vand.u32 %v703, 4294901760
  %705 = vmatmul.mubr.f32.gmra.mrb[0].mxu0 %v704
  %v706 = vpop.f32.mrb[0].mxu0
  %v707 = vadd.f32 %v613, %v706
  %v708 = vpop.f32.mrb[0].mxu0
  %709 = vdwg.mxu0
  %710 = vmatprep.subr.mxu0 0.0
  %v711 = vand.u32 %v596, 4294901760
  %v712 = vsub.f32 %v596, %v711
  %v713 = vand.u32 %v712, 4294901760
  %v714 = vsub.f32 %v712, %v713
  %v715 = vand.u32 %v714, 4294901760
  %716 = vmatpush1.msra.mxu0 %v715
  %717 = vmatprep.subr.mxu0 0.0
  %v718 = vand.u32 %v597, 4294901760
  %v719 = vsub.f32 %v597, %v718
  %v720 = vand.u32 %v719, 4294901760
  %v721 = vsub.f32 %v719, %v720
  %v722 = vand.u32 %v721, 4294901760
  %723 = vmatpush1.msra.mxu0 %v722
  %724 = vmatprep.subr.mxu0 0.0
  %v725 = vand.u32 %v598, 4294901760
  %v726 = vsub.f32 %v598, %v725
  %v727 = vand.u32 %v726, 4294901760
  %v728 = vsub.f32 %v726, %v727
  %v729 = vand.u32 %v728, 4294901760
  %730 = vmatpush1.msra.mxu0 %v729
  %731 = vmatprep.subr.mxu0 0.0
  %732 = vmatpush1.msra.mxu0 0.0
  %733 = vmatprep.subr.mxu0 0.0
  %734 = vmatpush1.msra.mxu0 0.0
  %735 = vmatprep.subr.mxu0 0.0
  %736 = vmatpush1.msra.mxu0 0.0
  %737 = vmatprep.subr.mxu0 0.0
  %738 = vmatpush1.msra.mxu0 0.0
  %739 = vmatprep.subr.mxu0 0.0
  %740 = vmatpush1.msra.mxu0 0.0
  %741 = vmatprep.subr.mxu0 0.0
  %742 = vmatpush1.msra.mxu0 0.0
  %743 = vmatprep.subr.mxu0 0.0
  %744 = vmatpush1.msra.mxu0 0.0
  %745 = vmatprep.subr.mxu0 0.0
  %746 = vmatpush1.msra.mxu0 0.0
  %747 = vmatprep.subr.mxu0 0.0
  %748 = vmatpush1.msra.mxu0 0.0
  %749 = vmatprep.subr.mxu0 0.0
  %750 = vmatpush1.msra.mxu0 0.0
  %751 = vmatprep.subr.mxu0 0.0
  %752 = vmatpush1.msra.mxu0 0.0
  %753 = vmatprep.subr.mxu0 0.0
  %754 = vmatpush1.msra.mxu0 0.0
  %755 = vmatprep.subr.mxu0 0.0
  %756 = vmatpush1.msra.mxu0 0.0
  %757 = vmatprep.subr.mxu0 0.0
  %758 = vmatpush1.msra.mxu0 0.0
  %759 = vmatprep.subr.mxu0 0.0
  %760 = vmatpush1.msra.mxu0 0.0
  %761 = vmatprep.subr.mxu0 0.0
  %762 = vmatpush1.msra.mxu0 0.0
  %763 = vmatprep.subr.mxu0 0.0
  %764 = vmatpush1.msra.mxu0 0.0
  %765 = vmatprep.subr.mxu0 0.0
  %766 = vmatpush1.msra.mxu0 0.0
  %767 = vmatprep.subr.mxu0 0.0
  %768 = vmatpush1.msra.mxu0 0.0
  %769 = vmatprep.subr.mxu0 0.0
  %770 = vmatpush1.msra.mxu0 0.0
  %771 = vmatprep.subr.mxu0 0.0
  %772 = vmatpush1.msra.mxu0 0.0
  %773 = vmatprep.subr.mxu0 0.0
  %774 = vmatpush1.msra.mxu0 0.0
  %775 = vmatprep.subr.mxu0 0.0
  %776 = vmatpush1.msra.mxu0 0.0
  %777 = vmatprep.subr.mxu0 0.0
  %778 = vmatpush1.msra.mxu0 0.0
  %779 = vmatprep.subr.mxu0 0.0
  %780 = vmatpush1.msra.mxu0 0.0
  %781 = vmatprep.subr.mxu0 0.0
  %782 = vmatpush1.msra.mxu0 0.0
  %783 = vmatprep.subr.mxu0 0.0
  %784 = vmatpush1.msra.mxu0 0.0
  %785 = vmatprep.subr.mxu0 0.0
  %786 = vmatpush1.msra.mxu0 0.0
  %787 = vmatprep.subr.mxu0 0.0
  %788 = vmatpush1.msra.mxu0 0.0
  %789 = vmatprep.mubr.f32.mxu0 0.0
  %v790 = vand.u32 %v617, 4294901760
  %791 = vmatmul.mubr.f32.gmra.mrb[0].mxu0 %v790
  %v792 = vpop.f32.mrb[0].mxu0
  %v793 = vadd.f32 %v697, %v792
  %v794 = vpop.f32.mrb[0].mxu0
  %795 = vmatprep.mubr.f32.mxu0 0.0
  %v796 = vand.u32 %v620, 4294901760
  %797 = vmatmul.mubr.f32.gmra.mrb[0].mxu0 %v796
  %v798 = vpop.f32.mrb[0].mxu0
  %v799 = vadd.f32 %v707, %v798
  %v800 = vpop.f32.mrb[0].mxu0
  %801 = vdwg.mxu0
  %802 = vmatprep.subr.mxu0 0.0
  %v803 = vand.u32 %v596, 4294901760
  %v804 = vsub.f32 %v596, %v803
  %805 = vmatpush1.msra.mxu0 %v804
  %806 = vmatprep.subr.mxu0 0.0
  %v807 = vand.u32 %v597, 4294901760
  %v808 = vsub.f32 %v597, %v807
  %809 = vmatpush1.msra.mxu0 %v808
  %810 = vmatprep.subr.mxu0 0.0
  %v811 = vand.u32 %v598, 4294901760
  %v812 = vsub.f32 %v598, %v811
  %813 = vmatpush1.msra.mxu0 %v812
  %814 = vmatprep.subr.mxu0 0.0
  %815 = vmatpush1.msra.mxu0 0.0
  %816 = vmatprep.subr.mxu0 0.0
  %817 = vmatpush1.msra.mxu0 0.0
  %818 = vmatprep.subr.mxu0 0.0
  %819 = vmatpush1.msra.mxu0 0.0
  %820 = vmatprep.subr.mxu0 0.0
  %821 = vmatpush1.msra.mxu0 0.0
  %822 = vmatprep.subr.mxu0 0.0
  %823 = vmatpush1.msra.mxu0 0.0
  %824 = vmatprep.subr.mxu0 0.0
  %825 = vmatpush1.msra.mxu0 0.0
  %826 = vmatprep.subr.mxu0 0.0
  %827 = vmatpush1.msra.mxu0 0.0
  %828 = vmatprep.subr.mxu0 0.0
  %829 = vmatpush1.msra.mxu0 0.0
  %830 = vmatprep.subr.mxu0 0.0
  %831 = vmatpush1.msra.mxu0 0.0
  %832 = vmatprep.subr.mxu0 0.0
  %833 = vmatpush1.msra.mxu0 0.0
  %834 = vmatprep.subr.mxu0 0.0
  %835 = vmatpush1.msra.mxu0 0.0
  %836 = vmatprep.subr.mxu0 0.0
  %837 = vmatpush1.msra.mxu0 0.0
  %838 = vmatprep.subr.mxu0 0.0
  %839 = vmatpush1.msra.mxu0 0.0
  %840 = vmatprep.subr.mxu0 0.0
  %841 = vmatpush1.msra.mxu0 0.0
  %842 = vmatprep.subr.mxu0 0.0
  %843 = vmatpush1.msra.mxu0 0.0
  %844 = vmatprep.subr.mxu0 0.0
  %845 = vmatpush1.msra.mxu0 0.0
  %846 = vmatprep.subr.mxu0 0.0
  %847 = vmatpush1.msra.mxu0 0.0
  %848 = vmatprep.subr.mxu0 0.0
  %849 = vmatpush1.msra.mxu0 0.0
  %850 = vmatprep.subr.mxu0 0.0
  %851 = vmatpush1.msra.mxu0 0.0
  %852 = vmatprep.subr.mxu0 0.0
  %853 = vmatpush1.msra.mxu0 0.0
  %854 = vmatprep.subr.mxu0 0.0
  %855 = vmatpush1.msra.mxu0 0.0
  %856 = vmatprep.subr.mxu0 0.0
  %857 = vmatpush1.msra.mxu0 0.0
  %858 = vmatprep.subr.mxu0 0.0
  %859 = vmatpush1.msra.mxu0 0.0
  %860 = vmatprep.subr.mxu0 0.0
  %861 = vmatpush1.msra.mxu0 0.0
  %862 = vmatprep.subr.mxu0 0.0
  %863 = vmatpush1.msra.mxu0 0.0
  %864 = vmatprep.subr.mxu0 0.0
  %865 = vmatpush1.msra.mxu0 0.0
  %866 = vmatprep.subr.mxu0 0.0
  %867 = vmatpush1.msra.mxu0 0.0
  %868 = vmatprep.subr.mxu0 0.0
  %869 = vmatpush1.msra.mxu0 0.0
  %870 = vmatprep.subr.mxu0 0.0
  %871 = vmatpush1.msra.mxu0 0.0
  %872 = vmatprep.mubr.f32.mxu0 0.0
  %v873 = vand.u32 %v617, 4294901760
  %v874 = vsub.f32 %v617, %v873
  %875 = vmatmul.mubr.f32.gmra.mrb[0].mxu0 %v874
  %v876 = vpop.f32.mrb[0].mxu0
  %v877 = vadd.f32 %v793, %v876
  %v878 = vpop.f32.mrb[0].mxu0
  %879 = vmatprep.mubr.f32.mxu0 0.0
  %v880 = vand.u32 %v620, 4294901760
  %v881 = vsub.f32 %v620, %v880
  %882 = vmatmul.mubr.f32.gmra.mrb[0].mxu0 %v881
  %v883 = vpop.f32.mrb[0].mxu0
  %v884 = vadd.f32 %v799, %v883
  %v885 = vpop.f32.mrb[0].mxu0
  %886 = vdwg.mxu0
  %887 = vmatprep.subr.mxu0 0.0
  %v888 = vand.u32 %v596, 4294901760
  %889 = vmatpush1.msra.mxu0 %v888
  %890 = vmatprep.subr.mxu0 0.0
  %v891 = vand.u32 %v597, 4294901760
  %892 = vmatpush1.msra.mxu0 %v891
  %893 = vmatprep.subr.mxu0 0.0
  %v894 = vand.u32 %v598, 4294901760
  %895 = vmatpush1.msra.mxu0 %v894
  %896 = vmatprep.subr.mxu0 0.0
  %897 = vmatpush1.msra.mxu0 0.0
  %898 = vmatprep.subr.mxu0 0.0
  %899 = vmatpush1.msra.mxu0 0.0
  %900 = vmatprep.subr.mxu0 0.0
  %901 = vmatpush1.msra.mxu0 0.0
  %902 = vmatprep.subr.mxu0 0.0
  %903 = vmatpush1.msra.mxu0 0.0
  %904 = vmatprep.subr.mxu0 0.0
  %905 = vmatpush1.msra.mxu0 0.0
  %906 = vmatprep.subr.mxu0 0.0
  %907 = vmatpush1.msra.mxu0 0.0
  %908 = vmatprep.subr.mxu0 0.0
  %909 = vmatpush1.msra.mxu0 0.0
  %910 = vmatprep.subr.mxu0 0.0
  %911 = vmatpush1.msra.mxu0 0.0
  %912 = vmatprep.subr.mxu0 0.0
  %913 = vmatpush1.msra.mxu0 0.0
  %914 = vmatprep.subr.mxu0 0.0
  %915 = vmatpush1.msra.mxu0 0.0
  %916 = vmatprep.subr.mxu0 0.0
  %917 = vmatpush1.msra.mxu0 0.0
  %918 = vmatprep.subr.mxu0 0.0
  %919 = vmatpush1.msra.mxu0 0.0
  %920 = vmatprep.subr.mxu0 0.0
  %921 = vmatpush1.msra.mxu0 0.0
  %922 = vmatprep.subr.mxu0 0.0
  %923 = vmatpush1.msra.mxu0 0.0
  %924 = vmatprep.subr.mxu0 0.0
  %925 = vmatpush1.msra.mxu0 0.0
  %926 = vmatprep.subr.mxu0 0.0
  %927 = vmatpush1.msra.mxu0 0.0
  %928 = vmatprep.subr.mxu0 0.0
  %929 = vmatpush1.msra.mxu0 0.0
  %930 = vmatprep.subr.mxu0 0.0
  %931 = vmatpush1.msra.mxu0 0.0
  %932 = vmatprep.subr.mxu0 0.0
  %933 = vmatpush1.msra.mxu0 0.0
  %934 = vmatprep.subr.mxu0 0.0
  %935 = vmatpush1.msra.mxu0 0.0
  %936 = vmatprep.subr.mxu0 0.0
  %937 = vmatpush1.msra.mxu0 0.0
  %938 = vmatprep.subr.mxu0 0.0
  %939 = vmatpush1.msra.mxu0 0.0
  %940 = vmatprep.subr.mxu0 0.0
  %941 = vmatpush1.msra.mxu0 0.0
  %942 = vmatprep.subr.mxu0 0.0
  %943 = vmatpush1.msra.mxu0 0.0
  %944 = vmatprep.subr.mxu0 0.0
  %945 = vmatpush1.msra.mxu0 0.0
  %946 = vmatprep.subr.mxu0 0.0
  %947 = vmatpush1.msra.mxu0 0.0
  %948 = vmatprep.subr.mxu0 0.0
  %949 = vmatpush1.msra.mxu0 0.0
  %950 = vmatprep.subr.mxu0 0.0
  %951 = vmatpush1.msra.mxu0 0.0
  %952 = vmatprep.subr.mxu0 0.0
  %953 = vmatpush1.msra.mxu0 0.0
  %954 = vmatprep.mubr.f32.mxu0 0.0
  %v955 = vand.u32 %v617, 4294901760
  %v956 = vsub.f32 %v617, %v955
  %v957 = vand.u32 %v956, 4294901760
  %958 = vmatmul.mubr.f32.gmra.mrb[0].mxu0 %v957
  %v959 = vpop.f32.mrb[0].mxu0
  %v960 = vadd.f32 %v877, %v959
  %v961 = vpop.f32.mrb[0].mxu0
  %962 = vmatprep.mubr.f32.mxu0 0.0
  %v963 = vand.u32 %v620, 4294901760
  %v964 = vsub.f32 %v620, %v963
  %v965 = vand.u32 %v964, 4294901760
  %966 = vmatmul.mubr.f32.gmra.mrb[0].mxu0 %v965
  %v967 = vpop.f32.mrb[0].mxu0
  %v968 = vadd.f32 %v884, %v967
  %v969 = vpop.f32.mrb[0].mxu0
  %970 = vdwg.mxu0
  %971 = vmatprep.subr.mxu0 0.0
  %v972 = vand.u32 %v596, 4294901760
  %v973 = vsub.f32 %v596, %v972
  %v974 = vand.u32 %v973, 4294901760
  %975 = vmatpush1.msra.mxu0 %v974
  %976 = vmatprep.subr.mxu0 0.0
  %v977 = vand.u32 %v597, 4294901760
  %v978 = vsub.f32 %v597, %v977
  %v979 = vand.u32 %v978, 4294901760
  %980 = vmatpush1.msra.mxu0 %v979
  %981 = vmatprep.subr.mxu0 0.0
  %v982 = vand.u32 %v598, 4294901760
  %v983 = vsub.f32 %v598, %v982
  %v984 = vand.u32 %v983, 4294901760
  %985 = vmatpush1.msra.mxu0 %v984
  %986 = vmatprep.subr.mxu0 0.0
  %987 = vmatpush1.msra.mxu0 0.0
  %988 = vmatprep.subr.mxu0 0.0
  %989 = vmatpush1.msra.mxu0 0.0
  %990 = vmatprep.subr.mxu0 0.0
  %991 = vmatpush1.msra.mxu0 0.0
  %992 = vmatprep.subr.mxu0 0.0
  %993 = vmatpush1.msra.mxu0 0.0
  %994 = vmatprep.subr.mxu0 0.0
  %995 = vmatpush1.msra.mxu0 0.0
  %996 = vmatprep.subr.mxu0 0.0
  %997 = vmatpush1.msra.mxu0 0.0
  %998 = vmatprep.subr.mxu0 0.0
  %999 = vmatpush1.msra.mxu0 0.0
  %1000 = vmatprep.subr.mxu0 0.0
  %1001 = vmatpush1.msra.mxu0 0.0
  %1002 = vmatprep.subr.mxu0 0.0
  %1003 = vmatpush1.msra.mxu0 0.0
  %1004 = vmatprep.subr.mxu0 0.0
  %1005 = vmatpush1.msra.mxu0 0.0
  %1006 = vmatprep.subr.mxu0 0.0
  %1007 = vmatpush1.msra.mxu0 0.0
  %1008 = vmatprep.subr.mxu0 0.0
  %1009 = vmatpush1.msra.mxu0 0.0
  %1010 = vmatprep.subr.mxu0 0.0
  %1011 = vmatpush1.msra.mxu0 0.0
  %1012 = vmatprep.subr.mxu0 0.0
  %1013 = vmatpush1.msra.mxu0 0.0
  %1014 = vmatprep.subr.mxu0 0.0
  %1015 = vmatpush1.msra.mxu0 0.0
  %1016 = vmatprep.subr.mxu0 0.0
  %1017 = vmatpush1.msra.mxu0 0.0
  %1018 = vmatprep.subr.mxu0 0.0
  %1019 = vmatpush1.msra.mxu0 0.0
  %1020 = vmatprep.subr.mxu0 0.0
  %1021 = vmatpush1.msra.mxu0 0.0
  %1022 = vmatprep.subr.mxu0 0.0
  %1023 = vmatpush1.msra.mxu0 0.0
  %1024 = vmatprep.subr.mxu0 0.0
  %1025 = vmatpush1.msra.mxu0 0.0
  %1026 = vmatprep.subr.mxu0 0.0
  %1027 = vmatpush1.msra.mxu0 0.0
  %1028 = vmatprep.subr.mxu0 0.0
  %1029 = vmatpush1.msra.mxu0 0.0
  %1030 = vmatprep.subr.mxu0 0.0
  %1031 = vmatpush1.msra.mxu0 0.0
  %1032 = vmatprep.subr.mxu0 0.0
  %1033 = vmatpush1.msra.mxu0 0.0
  %1034 = vmatprep.subr.mxu0 0.0
  %1035 = vmatpush1.msra.mxu0 0.0
  %1036 = vmatprep.subr.mxu0 0.0
  %1037 = vmatpush1.msra.mxu0 0.0
  %1038 = vmatprep.subr.mxu0 0.0
  %1039 = vmatpush1.msra.mxu0 0.0
  %1040 = vmatprep.subr.mxu0 0.0
  %1041 = vmatpush1.msra.mxu0 0.0
  %1042 = vmatprep.subr.mxu0 0.0
  %1043 = vmatpush1.msra.mxu0 0.0
  %1044 = vmatprep.mubr.f32.mxu0 0.0
  %v1045 = vand.u32 %v617, 4294901760
  %1046 = vmatmul.mubr.f32.gmra.mrb[0].mxu0 %v1045
  %v1047 = vpop.f32.mrb[0].mxu0
  %v1048 = vadd.f32 %v960, %v1047
  %v1049 = vpop.f32.mrb[0].mxu0
  %1050 = vmatprep.mubr.f32.mxu0 0.0
  %v1051 = vand.u32 %v620, 4294901760
  %1052 = vmatmul.mubr.f32.gmra.mrb[0].mxu0 %v1051
  %v1053 = vpop.f32.mrb[0].mxu0
  %v1054 = vadd.f32 %v968, %v1053
  %v1055 = vpop.f32.mrb[0].mxu0
  %1056 = vdwg.mxu0
  %1057 = vmatprep.subr.mxu0 0.0
  %v1058 = vand.u32 %v596, 4294901760
  %1059 = vmatpush1.msra.mxu0 %v1058
  %1060 = vmatprep.subr.mxu0 0.0
  %v1061 = vand.u32 %v597, 4294901760
  %1062 = vmatpush1.msra.mxu0 %v1061
  %1063 = vmatprep.subr.mxu0 0.0
  %v1064 = vand.u32 %v598, 4294901760
  %1065 = vmatpush1.msra.mxu0 %v1064
  %1066 = vmatprep.subr.mxu0 0.0
  %1067 = vmatpush1.msra.mxu0 0.0
  %1068 = vmatprep.subr.mxu0 0.0
  %1069 = vmatpush1.msra.mxu0 0.0
  %1070 = vmatprep.subr.mxu0 0.0
  %1071 = vmatpush1.msra.mxu0 0.0
  %1072 = vmatprep.subr.mxu0 0.0
  %1073 = vmatpush1.msra.mxu0 0.0
  %1074 = vmatprep.subr.mxu0 0.0
  %1075 = vmatpush1.msra.mxu0 0.0
  %1076 = vmatprep.subr.mxu0 0.0
  %1077 = vmatpush1.msra.mxu0 0.0
  %1078 = vmatprep.subr.mxu0 0.0
  %1079 = vmatpush1.msra.mxu0 0.0
  %1080 = vmatprep.subr.mxu0 0.0
  %1081 = vmatpush1.msra.mxu0 0.0
  %1082 = vmatprep.subr.mxu0 0.0
  %1083 = vmatpush1.msra.mxu0 0.0
  %1084 = vmatprep.subr.mxu0 0.0
  %1085 = vmatpush1.msra.mxu0 0.0
  %1086 = vmatprep.subr.mxu0 0.0
  %1087 = vmatpush1.msra.mxu0 0.0
  %1088 = vmatprep.subr.mxu0 0.0
  %1089 = vmatpush1.msra.mxu0 0.0
  %1090 = vmatprep.subr.mxu0 0.0
  %1091 = vmatpush1.msra.mxu0 0.0
  %1092 = vmatprep.subr.mxu0 0.0
  %1093 = vmatpush1.msra.mxu0 0.0
  %1094 = vmatprep.subr.mxu0 0.0
  %1095 = vmatpush1.msra.mxu0 0.0
  %1096 = vmatprep.subr.mxu0 0.0
  %1097 = vmatpush1.msra.mxu0 0.0
  %1098 = vmatprep.subr.mxu0 0.0
  %1099 = vmatpush1.msra.mxu0 0.0
  %1100 = vmatprep.subr.mxu0 0.0
  %1101 = vmatpush1.msra.mxu0 0.0
  %1102 = vmatprep.subr.mxu0 0.0
  %1103 = vmatpush1.msra.mxu0 0.0
  %1104 = vmatprep.subr.mxu0 0.0
  %1105 = vmatpush1.msra.mxu0 0.0
  %1106 = vmatprep.subr.mxu0 0.0
  %1107 = vmatpush1.msra.mxu0 0.0
  %1108 = vmatprep.subr.mxu0 0.0
  %1109 = vmatpush1.msra.mxu0 0.0
  %1110 = vmatprep.subr.mxu0 0.0
  %1111 = vmatpush1.msra.mxu0 0.0
  %1112 = vmatprep.subr.mxu0 0.0
  %1113 = vmatpush1.msra.mxu0 0.0
  %1114 = vmatprep.subr.mxu0 0.0
  %1115 = vmatpush1.msra.mxu0 0.0
  %1116 = vmatprep.subr.mxu0 0.0
  %1117 = vmatpush1.msra.mxu0 0.0
  %1118 = vmatprep.subr.mxu0 0.0
  %1119 = vmatpush1.msra.mxu0 0.0
  %1120 = vmatprep.subr.mxu0 0.0
  %1121 = vmatpush1.msra.mxu0 0.0
  %1122 = vmatprep.subr.mxu0 0.0
  %1123 = vmatpush1.msra.mxu0 0.0
  %1124 = vmatprep.mubr.f32.mxu0 0.0
  %v1125 = vand.u32 %v617, 4294901760
  %1126 = vmatmul.mubr.f32.gmra.mrb[0].mxu0 %v1125
  %v1127 = vpop.f32.mrb[0].mxu0
  %v1128 = vadd.f32 %v1048, %v1127
  %v1129 = vpop.f32.mrb[0].mxu0
  %1130 = vmatprep.mubr.f32.mxu0 0.0
  %v1131 = vand.u32 %v620, 4294901760
  %1132 = vmatmul.mubr.f32.gmra.mrb[0].mxu0 %v1131
  %v1133 = vpop.f32.mrb[0].mxu0
  %v1134 = vadd.f32 %v1054, %v1133
  %v1135 = vpop.f32.mrb[0].mxu0
  %1136 = vdwg.mxu0
  %v1137 = vmax.f32 %v1128, 0.0
  %v1138 = vmax.f32 %v1134, 0.0
  %s1139 = scalar_lea.vmem %s1, 48
  %v1140 = vld [vmem:[%s1139] sm:$0xff]
  %v1141 = vld [vmem:[%s1139 + $0x8] sm:$0xff]
  %s1142 = scalar_lea.vmem %s2, 48
  %v1143 = vld [vmem:[%s1142] sm:$0xff]
  %v1144 = vld [vmem:[%s1142 + $0x8] sm:$0xff]
  %1146 = vset.pattern.permute.xlu0 0
  %1147 = vperm.xlu0 %1146, %v1143
  %v1148 = vpop.permute.xlu0 %1147
  %1151 = vset.pattern.permute.xlu0 0
  %1152 = vperm.xlu0 %1151, %v1144
  %v1153 = vpop.permute.xlu0 %1152
  %vm1155 = vcmask 130048
  %v1157 = vsel %vm1155, %v1140, 0
  %v1160 = vsel %vm1155, %v1141, 0
  %1162 = vmatprep.subr.mxu0 0.0
  %v1163 = vand.u32 %v1137, 4294901760
  %1164 = vmatpush1.msra.mxu0 %v1163
  %1165 = vmatprep.subr.mxu0 0.0
  %v1166 = vand.u32 %v1138, 4294901760
  %1167 = vmatpush1.msra.mxu0 %v1166
  %1168 = vmatprep.subr.mxu0 0.0
  %1169 = vmatpush1.msra.mxu0 0.0
  %1170 = vmatprep.subr.mxu0 0.0
  %1171 = vmatpush1.msra.mxu0 0.0
  %1172 = vmatprep.subr.mxu0 0.0
  %1173 = vmatpush1.msra.mxu0 0.0
  %1174 = vmatprep.subr.mxu0 0.0
  %1175 = vmatpush1.msra.mxu0 0.0
  %1176 = vmatprep.subr.mxu0 0.0
  %1177 = vmatpush1.msra.mxu0 0.0
  %1178 = vmatprep.subr.mxu0 0.0
  %1179 = vmatpush1.msra.mxu0 0.0
  %1180 = vmatprep.subr.mxu0 0.0
  %1181 = vmatpush1.msra.mxu0 0.0
  %1182 = vmatprep.subr.mxu0 0.0
  %1183 = vmatpush1.msra.mxu0 0.0
  %1184 = vmatprep.subr.mxu0 0.0
  %1185 = vmatpush1.msra.mxu0 0.0
  %1186 = vmatprep.subr.mxu0 0.0
  %1187 = vmatpush1.msra.mxu0 0.0
  %1188 = vmatprep.subr.mxu0 0.0
  %1189 = vmatpush1.msra.mxu0 0.0
  %1190 = vmatprep.subr.mxu0 0.0
  %1191 = vmatpush1.msra.mxu0 0.0
  %1192 = vmatprep.subr.mxu0 0.0
  %1193 = vmatpush1.msra.mxu0 0.0
  %1194 = vmatprep.subr.mxu0 0.0
  %1195 = vmatpush1.msra.mxu0 0.0
  %1196 = vmatprep.subr.mxu0 0.0
  %1197 = vmatpush1.msra.mxu0 0.0
  %1198 = vmatprep.subr.mxu0 0.0
  %1199 = vmatpush1.msra.mxu0 0.0
  %1200 = vmatprep.subr.mxu0 0.0
  %1201 = vmatpush1.msra.mxu0 0.0
  %1202 = vmatprep.subr.mxu0 0.0
  %1203 = vmatpush1.msra.mxu0 0.0
  %1204 = vmatprep.subr.mxu0 0.0
  %1205 = vmatpush1.msra.mxu0 0.0
  %1206 = vmatprep.subr.mxu0 0.0
  %1207 = vmatpush1.msra.mxu0 0.0
  %1208 = vmatprep.subr.mxu0 0.0
  %1209 = vmatpush1.msra.mxu0 0.0
  %1210 = vmatprep.subr.mxu0 0.0
  %1211 = vmatpush1.msra.mxu0 0.0
  %1212 = vmatprep.subr.mxu0 0.0
  %1213 = vmatpush1.msra.mxu0 0.0
  %1214 = vmatprep.subr.mxu0 0.0
  %1215 = vmatpush1.msra.mxu0 0.0
  %1216 = vmatprep.subr.mxu0 0.0
  %1217 = vmatpush1.msra.mxu0 0.0
  %1218 = vmatprep.subr.mxu0 0.0
  %1219 = vmatpush1.msra.mxu0 0.0
  %1220 = vmatprep.subr.mxu0 0.0
  %1221 = vmatpush1.msra.mxu0 0.0
  %1222 = vmatprep.subr.mxu0 0.0
  %1223 = vmatpush1.msra.mxu0 0.0
  %1224 = vmatprep.subr.mxu0 0.0
  %1225 = vmatpush1.msra.mxu0 0.0
  %1226 = vmatprep.subr.mxu0 0.0
  %1227 = vmatpush1.msra.mxu0 0.0
  %1228 = vmatprep.mubr.f32.mxu0 0.0
  %v1229 = vand.u32 %v1157, 4294901760
  %v1230 = vsub.f32 %v1157, %v1229
  %v1231 = vand.u32 %v1230, 4294901760
  %v1232 = vsub.f32 %v1230, %v1231
  %v1233 = vand.u32 %v1232, 4294901760
  %1234 = vmatmul.mubr.f32.gmra.mrb[0].mxu0 %v1233
  %v1235 = vpop.f32.mrb[0].mxu0
  %v1236 = vadd.f32 %v1148, %v1235
  %v1237 = vpop.f32.mrb[0].mxu0
  %1238 = vmatprep.mubr.f32.mxu0 0.0
  %v1239 = vand.u32 %v1160, 4294901760
  %v1240 = vsub.f32 %v1160, %v1239
  %v1241 = vand.u32 %v1240, 4294901760
  %v1242 = vsub.f32 %v1240, %v1241
  %v1243 = vand.u32 %v1242, 4294901760
  %1244 = vmatmul.mubr.f32.gmra.mrb[0].mxu0 %v1243
  %v1245 = vpop.f32.mrb[0].mxu0
  %v1246 = vadd.f32 %v1153, %v1245
  %v1247 = vpop.f32.mrb[0].mxu0
  %1248 = vdwg.mxu0
  %1249 = vmatprep.subr.mxu0 0.0
  %v1250 = vand.u32 %v1137, 4294901760
  %v1251 = vsub.f32 %v1137, %v1250
  %v1252 = vand.u32 %v1251, 4294901760
  %v1253 = vsub.f32 %v1251, %v1252
  %v1254 = vand.u32 %v1253, 4294901760
  %1255 = vmatpush1.msra.mxu0 %v1254
  %1256 = vmatprep.subr.mxu0 0.0
  %v1257 = vand.u32 %v1138, 4294901760
  %v1258 = vsub.f32 %v1138, %v1257
  %v1259 = vand.u32 %v1258, 4294901760
  %v1260 = vsub.f32 %v1258, %v1259
  %v1261 = vand.u32 %v1260, 4294901760
  %1262 = vmatpush1.msra.mxu0 %v1261
  %1263 = vmatprep.subr.mxu0 0.0
  %1264 = vmatpush1.msra.mxu0 0.0
  %1265 = vmatprep.subr.mxu0 0.0
  %1266 = vmatpush1.msra.mxu0 0.0
  %1267 = vmatprep.subr.mxu0 0.0
  %1268 = vmatpush1.msra.mxu0 0.0
  %1269 = vmatprep.subr.mxu0 0.0
  %1270 = vmatpush1.msra.mxu0 0.0
  %1271 = vmatprep.subr.mxu0 0.0
  %1272 = vmatpush1.msra.mxu0 0.0
  %1273 = vmatprep.subr.mxu0 0.0
  %1274 = vmatpush1.msra.mxu0 0.0
  %1275 = vmatprep.subr.mxu0 0.0
  %1276 = vmatpush1.msra.mxu0 0.0
  %1277 = vmatprep.subr.mxu0 0.0
  %1278 = vmatpush1.msra.mxu0 0.0
  %1279 = vmatprep.subr.mxu0 0.0
  %1280 = vmatpush1.msra.mxu0 0.0
  %1281 = vmatprep.subr.mxu0 0.0
  %1282 = vmatpush1.msra.mxu0 0.0
  %1283 = vmatprep.subr.mxu0 0.0
  %1284 = vmatpush1.msra.mxu0 0.0
  %1285 = vmatprep.subr.mxu0 0.0
  %1286 = vmatpush1.msra.mxu0 0.0
  %1287 = vmatprep.subr.mxu0 0.0
  %1288 = vmatpush1.msra.mxu0 0.0
  %1289 = vmatprep.subr.mxu0 0.0
  %1290 = vmatpush1.msra.mxu0 0.0
  %1291 = vmatprep.subr.mxu0 0.0
  %1292 = vmatpush1.msra.mxu0 0.0
  %1293 = vmatprep.subr.mxu0 0.0
  %1294 = vmatpush1.msra.mxu0 0.0
  %1295 = vmatprep.subr.mxu0 0.0
  %1296 = vmatpush1.msra.mxu0 0.0
  %1297 = vmatprep.subr.mxu0 0.0
  %1298 = vmatpush1.msra.mxu0 0.0
  %1299 = vmatprep.subr.mxu0 0.0
  %1300 = vmatpush1.msra.mxu0 0.0
  %1301 = vmatprep.subr.mxu0 0.0
  %1302 = vmatpush1.msra.mxu0 0.0
  %1303 = vmatprep.subr.mxu0 0.0
  %1304 = vmatpush1.msra.mxu0 0.0
  %1305 = vmatprep.subr.mxu0 0.0
  %1306 = vmatpush1.msra.mxu0 0.0
  %1307 = vmatprep.subr.mxu0 0.0
  %1308 = vmatpush1.msra.mxu0 0.0
  %1309 = vmatprep.subr.mxu0 0.0
  %1310 = vmatpush1.msra.mxu0 0.0
  %1311 = vmatprep.subr.mxu0 0.0
  %1312 = vmatpush1.msra.mxu0 0.0
  %1313 = vmatprep.subr.mxu0 0.0
  %1314 = vmatpush1.msra.mxu0 0.0
  %1315 = vmatprep.subr.mxu0 0.0
  %1316 = vmatpush1.msra.mxu0 0.0
  %1317 = vmatprep.subr.mxu0 0.0
  %1318 = vmatpush1.msra.mxu0 0.0
  %1319 = vmatprep.subr.mxu0 0.0
  %1320 = vmatpush1.msra.mxu0 0.0
  %1321 = vmatprep.subr.mxu0 0.0
  %1322 = vmatpush1.msra.mxu0 0.0
  %1323 = vmatprep.mubr.f32.mxu0 0.0
  %v1324 = vand.u32 %v1157, 4294901760
  %1325 = vmatmul.mubr.f32.gmra.mrb[0].mxu0 %v1324
  %v1326 = vpop.f32.mrb[0].mxu0
  %v1327 = vadd.f32 %v1236, %v1326
  %v1328 = vpop.f32.mrb[0].mxu0
  %1329 = vmatprep.mubr.f32.mxu0 0.0
  %v1330 = vand.u32 %v1160, 4294901760
  %1331 = vmatmul.mubr.f32.gmra.mrb[0].mxu0 %v1330
  %v1332 = vpop.f32.mrb[0].mxu0
  %v1333 = vadd.f32 %v1246, %v1332
  %v1334 = vpop.f32.mrb[0].mxu0
  %1335 = vdwg.mxu0
  %1336 = vmatprep.subr.mxu0 0.0
  %v1337 = vand.u32 %v1137, 4294901760
  %v1338 = vsub.f32 %v1137, %v1337
  %1339 = vmatpush1.msra.mxu0 %v1338
  %1340 = vmatprep.subr.mxu0 0.0
  %v1341 = vand.u32 %v1138, 4294901760
  %v1342 = vsub.f32 %v1138, %v1341
  %1343 = vmatpush1.msra.mxu0 %v1342
  %1344 = vmatprep.subr.mxu0 0.0
  %1345 = vmatpush1.msra.mxu0 0.0
  %1346 = vmatprep.subr.mxu0 0.0
  %1347 = vmatpush1.msra.mxu0 0.0
  %1348 = vmatprep.subr.mxu0 0.0
  %1349 = vmatpush1.msra.mxu0 0.0
  %1350 = vmatprep.subr.mxu0 0.0
  %1351 = vmatpush1.msra.mxu0 0.0
  %1352 = vmatprep.subr.mxu0 0.0
  %1353 = vmatpush1.msra.mxu0 0.0
  %1354 = vmatprep.subr.mxu0 0.0
  %1355 = vmatpush1.msra.mxu0 0.0
  %1356 = vmatprep.subr.mxu0 0.0
  %1357 = vmatpush1.msra.mxu0 0.0
  %1358 = vmatprep.subr.mxu0 0.0
  %1359 = vmatpush1.msra.mxu0 0.0
  %1360 = vmatprep.subr.mxu0 0.0
  %1361 = vmatpush1.msra.mxu0 0.0
  %1362 = vmatprep.subr.mxu0 0.0
  %1363 = vmatpush1.msra.mxu0 0.0
  %1364 = vmatprep.subr.mxu0 0.0
  %1365 = vmatpush1.msra.mxu0 0.0
  %1366 = vmatprep.subr.mxu0 0.0
  %1367 = vmatpush1.msra.mxu0 0.0
  %1368 = vmatprep.subr.mxu0 0.0
  %1369 = vmatpush1.msra.mxu0 0.0
  %1370 = vmatprep.subr.mxu0 0.0
  %1371 = vmatpush1.msra.mxu0 0.0
  %1372 = vmatprep.subr.mxu0 0.0
  %1373 = vmatpush1.msra.mxu0 0.0
  %1374 = vmatprep.subr.mxu0 0.0
  %1375 = vmatpush1.msra.mxu0 0.0
  %1376 = vmatprep.subr.mxu0 0.0
  %1377 = vmatpush1.msra.mxu0 0.0
  %1378 = vmatprep.subr.mxu0 0.0
  %1379 = vmatpush1.msra.mxu0 0.0
  %1380 = vmatprep.subr.mxu0 0.0
  %1381 = vmatpush1.msra.mxu0 0.0
  %1382 = vmatprep.subr.mxu0 0.0
  %1383 = vmatpush1.msra.mxu0 0.0
  %1384 = vmatprep.subr.mxu0 0.0
  %1385 = vmatpush1.msra.mxu0 0.0
  %1386 = vmatprep.subr.mxu0 0.0
  %1387 = vmatpush1.msra.mxu0 0.0
  %1388 = vmatprep.subr.mxu0 0.0
  %1389 = vmatpush1.msra.mxu0 0.0
  %1390 = vmatprep.subr.mxu0 0.0
  %1391 = vmatpush1.msra.mxu0 0.0
  %1392 = vmatprep.subr.mxu0 0.0
  %1393 = vmatpush1.msra.mxu0 0.0
  %1394 = vmatprep.subr.mxu0 0.0
  %1395 = vmatpush1.msra.mxu0 0.0
  %1396 = vmatprep.subr.mxu0 0.0
  %1397 = vmatpush1.msra.mxu0 0.0
  %1398 = vmatprep.subr.mxu0 0.0
  %1399 = vmatpush1.msra.mxu0 0.0
  %1400 = vmatprep.subr.mxu0 0.0
  %1401 = vmatpush1.msra.mxu0 0.0
  %1402 = vmatprep.subr.mxu0 0.0
  %1403 = vmatpush1.msra.mxu0 0.0
  %1404 = vmatprep.mubr.f32.mxu0 0.0
  %v1405 = vand.u32 %v1157, 4294901760
  %v1406 = vsub.f32 %v1157, %v1405
  %1407 = vmatmul.mubr.f32.gmra.mrb[0].mxu0 %v1406
  %v1408 = vpop.f32.mrb[0].mxu0
  %v1409 = vadd.f32 %v1327, %v1408
  %v1410 = vpop.f32.mrb[0].mxu0
  %1411 = vmatprep.mubr.f32.mxu0 0.0
  %v1412 = vand.u32 %v1160, 4294901760
  %v1413 = vsub.f32 %v1160, %v1412
  %1414 = vmatmul.mubr.f32.gmra.mrb[0].mxu0 %v1413
  %v1415 = vpop.f32.mrb[0].mxu0
  %v1416 = vadd.f32 %v1333, %v1415
  %v1417 = vpop.f32.mrb[0].mxu0
  %1418 = vdwg.mxu0
  %1419 = vmatprep.subr.mxu0 0.0
  %v1420 = vand.u32 %v1137, 4294901760
  %1421 = vmatpush1.msra.mxu0 %v1420
  %1422 = vmatprep.subr.mxu0 0.0
  %v1423 = vand.u32 %v1138, 4294901760
  %1424 = vmatpush1.msra.mxu0 %v1423
  %1425 = vmatprep.subr.mxu0 0.0
  %1426 = vmatpush1.msra.mxu0 0.0
  %1427 = vmatprep.subr.mxu0 0.0
  %1428 = vmatpush1.msra.mxu0 0.0
  %1429 = vmatprep.subr.mxu0 0.0
  %1430 = vmatpush1.msra.mxu0 0.0
  %1431 = vmatprep.subr.mxu0 0.0
  %1432 = vmatpush1.msra.mxu0 0.0
  %1433 = vmatprep.subr.mxu0 0.0
  %1434 = vmatpush1.msra.mxu0 0.0
  %1435 = vmatprep.subr.mxu0 0.0
  %1436 = vmatpush1.msra.mxu0 0.0
  %1437 = vmatprep.subr.mxu0 0.0
  %1438 = vmatpush1.msra.mxu0 0.0
  %1439 = vmatprep.subr.mxu0 0.0
  %1440 = vmatpush1.msra.mxu0 0.0
  %1441 = vmatprep.subr.mxu0 0.0
  %1442 = vmatpush1.msra.mxu0 0.0
  %1443 = vmatprep.subr.mxu0 0.0
  %1444 = vmatpush1.msra.mxu0 0.0
  %1445 = vmatprep.subr.mxu0 0.0
  %1446 = vmatpush1.msra.mxu0 0.0
  %1447 = vmatprep.subr.mxu0 0.0
  %1448 = vmatpush1.msra.mxu0 0.0
  %1449 = vmatprep.subr.mxu0 0.0
  %1450 = vmatpush1.msra.mxu0 0.0
  %1451 = vmatprep.subr.mxu0 0.0
  %1452 = vmatpush1.msra.mxu0 0.0
  %1453 = vmatprep.subr.mxu0 0.0
  %1454 = vmatpush1.msra.mxu0 0.0
  %1455 = vmatprep.subr.mxu0 0.0
  %1456 = vmatpush1.msra.mxu0 0.0
  %1457 = vmatprep.subr.mxu0 0.0
  %1458 = vmatpush1.msra.mxu0 0.0
  %1459 = vmatprep.subr.mxu0 0.0
  %1460 = vmatpush1.msra.mxu0 0.0
  %1461 = vmatprep.subr.mxu0 0.0
  %1462 = vmatpush1.msra.mxu0 0.0
  %1463 = vmatprep.subr.mxu0 0.0
  %1464 = vmatpush1.msra.mxu0 0.0
  %1465 = vmatprep.subr.mxu0 0.0
  %1466 = vmatpush1.msra.mxu0 0.0
  %1467 = vmatprep.subr.mxu0 0.0
  %1468 = vmatpush1.msra.mxu0 0.0
  %1469 = vmatprep.subr.mxu0 0.0
  %1470 = vmatpush1.msra.mxu0 0.0
  %1471 = vmatprep.subr.mxu0 0.0
  %1472 = vmatpush1.msra.mxu0 0.0
  %1473 = vmatprep.subr.mxu0 0.0
  %1474 = vmatpush1.msra.mxu0 0.0
  %1475 = vmatprep.subr.mxu0 0.0
  %1476 = vmatpush1.msra.mxu0 0.0
  %1477 = vmatprep.subr.mxu0 0.0
  %1478 = vmatpush1.msra.mxu0 0.0
  %1479 = vmatprep.subr.mxu0 0.0
  %1480 = vmatpush1.msra.mxu0 0.0
  %1481 = vmatprep.subr.mxu0 0.0
  %1482 = vmatpush1.msra.mxu0 0.0
  %1483 = vmatprep.subr.mxu0 0.0
  %1484 = vmatpush1.msra.mxu0 0.0
  %1485 = vmatprep.mubr.f32.mxu0 0.0
  %v1486 = vand.u32 %v1157, 4294901760
  %v1487 = vsub.f32 %v1157, %v1486
  %v1488 = vand.u32 %v1487, 4294901760
  %1489 = vmatmul.mubr.f32.gmra.mrb[0].mxu0 %v1488
  %v1490 = vpop.f32.mrb[0].mxu0
  %v1491 = vadd.f32 %v1409, %v1490
  %v1492 = vpop.f32.mrb[0].mxu0
  %1493 = vmatprep.mubr.f32.mxu0 0.0
  %v1494 = vand.u32 %v1160, 4294901760
  %v1495 = vsub.f32 %v1160, %v1494
  %v1496 = vand.u32 %v1495, 4294901760
  %1497 = vmatmul.mubr.f32.gmra.mrb[0].mxu0 %v1496
  %v1498 = vpop.f32.mrb[0].mxu0
  %v1499 = vadd.f32 %v1416, %v1498
  %v1500 = vpop.f32.mrb[0].mxu0
  %1501 = vdwg.mxu0
  %1502 = vmatprep.subr.mxu0 0.0
  %v1503 = vand.u32 %v1137, 4294901760
  %v1504 = vsub.f32 %v1137, %v1503
  %v1505 = vand.u32 %v1504, 4294901760
  %1506 = vmatpush1.msra.mxu0 %v1505
  %1507 = vmatprep.subr.mxu0 0.0
  %v1508 = vand.u32 %v1138, 4294901760
  %v1509 = vsub.f32 %v1138, %v1508
  %v1510 = vand.u32 %v1509, 4294901760
  %1511 = vmatpush1.msra.mxu0 %v1510
  %1512 = vmatprep.subr.mxu0 0.0
  %1513 = vmatpush1.msra.mxu0 0.0
  %1514 = vmatprep.subr.mxu0 0.0
  %1515 = vmatpush1.msra.mxu0 0.0
  %1516 = vmatprep.subr.mxu0 0.0
  %1517 = vmatpush1.msra.mxu0 0.0
  %1518 = vmatprep.subr.mxu0 0.0
  %1519 = vmatpush1.msra.mxu0 0.0
  %1520 = vmatprep.subr.mxu0 0.0
  %1521 = vmatpush1.msra.mxu0 0.0
  %1522 = vmatprep.subr.mxu0 0.0
  %1523 = vmatpush1.msra.mxu0 0.0
  %1524 = vmatprep.subr.mxu0 0.0
  %1525 = vmatpush1.msra.mxu0 0.0
  %1526 = vmatprep.subr.mxu0 0.0
  %1527 = vmatpush1.msra.mxu0 0.0
  %1528 = vmatprep.subr.mxu0 0.0
  %1529 = vmatpush1.msra.mxu0 0.0
  %1530 = vmatprep.subr.mxu0 0.0
  %1531 = vmatpush1.msra.mxu0 0.0
  %1532 = vmatprep.subr.mxu0 0.0
  %1533 = vmatpush1.msra.mxu0 0.0
  %1534 = vmatprep.subr.mxu0 0.0
  %1535 = vmatpush1.msra.mxu0 0.0
  %1536 = vmatprep.subr.mxu0 0.0
  %1537 = vmatpush1.msra.mxu0 0.0
  %1538 = vmatprep.subr.mxu0 0.0
  %1539 = vmatpush1.msra.mxu0 0.0
  %1540 = vmatprep.subr.mxu0 0.0
  %1541 = vmatpush1.msra.mxu0 0.0
  %1542 = vmatprep.subr.mxu0 0.0
  %1543 = vmatpush1.msra.mxu0 0.0
  %1544 = vmatprep.subr.mxu0 0.0
  %1545 = vmatpush1.msra.mxu0 0.0
  %1546 = vmatprep.subr.mxu0 0.0
  %1547 = vmatpush1.msra.mxu0 0.0
  %1548 = vmatprep.subr.mxu0 0.0
  %1549 = vmatpush1.msra.mxu0 0.0
  %1550 = vmatprep.subr.mxu0 0.0
  %1551 = vmatpush1.msra.mxu0 0.0
  %1552 = vmatprep.subr.mxu0 0.0
  %1553 = vmatpush1.msra.mxu0 0.0
  %1554 = vmatprep.subr.mxu0 0.0
  %1555 = vmatpush1.msra.mxu0 0.0
  %1556 = vmatprep.subr.mxu0 0.0
  %1557 = vmatpush1.msra.mxu0 0.0
  %1558 = vmatprep.subr.mxu0 0.0
  %1559 = vmatpush1.msra.mxu0 0.0
  %1560 = vmatprep.subr.mxu0 0.0
  %1561 = vmatpush1.msra.mxu0 0.0
  %1562 = vmatprep.subr.mxu0 0.0
  %1563 = vmatpush1.msra.mxu0 0.0
  %1564 = vmatprep.subr.mxu0 0.0
  %1565 = vmatpush1.msra.mxu0 0.0
  %1566 = vmatprep.subr.mxu0 0.0
  %1567 = vmatpush1.msra.mxu0 0.0
  %1568 = vmatprep.subr.mxu0 0.0
  %1569 = vmatpush1.msra.mxu0 0.0
  %1570 = vmatprep.subr.mxu0 0.0
  %1571 = vmatpush1.msra.mxu0 0.0
  %1572 = vmatprep.mubr.f32.mxu0 0.0
  %v1573 = vand.u32 %v1157, 4294901760
  %1574 = vmatmul.mubr.f32.gmra.mrb[0].mxu0 %v1573
  %v1575 = vpop.f32.mrb[0].mxu0
  %v1576 = vadd.f32 %v1491, %v1575
  %v1577 = vpop.f32.mrb[0].mxu0
  %1578 = vmatprep.mubr.f32.mxu0 0.0
  %v1579 = vand.u32 %v1160, 4294901760
  %1580 = vmatmul.mubr.f32.gmra.mrb[0].mxu0 %v1579
  %v1581 = vpop.f32.mrb[0].mxu0
  %v1582 = vadd.f32 %v1499, %v1581
  %v1583 = vpop.f32.mrb[0].mxu0
  %1584 = vdwg.mxu0
  %1585 = vmatprep.subr.mxu0 0.0
  %v1586 = vand.u32 %v1137, 4294901760
  %1587 = vmatpush1.msra.mxu0 %v1586
  %1588 = vmatprep.subr.mxu0 0.0
  %v1589 = vand.u32 %v1138, 4294901760
  %1590 = vmatpush1.msra.mxu0 %v1589
  %1591 = vmatprep.subr.mxu0 0.0
  %1592 = vmatpush1.msra.mxu0 0.0
  %1593 = vmatprep.subr.mxu0 0.0
  %1594 = vmatpush1.msra.mxu0 0.0
  %1595 = vmatprep.subr.mxu0 0.0
  %1596 = vmatpush1.msra.mxu0 0.0
  %1597 = vmatprep.subr.mxu0 0.0
  %1598 = vmatpush1.msra.mxu0 0.0
  %1599 = vmatprep.subr.mxu0 0.0
  %1600 = vmatpush1.msra.mxu0 0.0
  %1601 = vmatprep.subr.mxu0 0.0
  %1602 = vmatpush1.msra.mxu0 0.0
  %1603 = vmatprep.subr.mxu0 0.0
  %1604 = vmatpush1.msra.mxu0 0.0
  %1605 = vmatprep.subr.mxu0 0.0
  %1606 = vmatpush1.msra.mxu0 0.0
  %1607 = vmatprep.subr.mxu0 0.0
  %1608 = vmatpush1.msra.mxu0 0.0
  %1609 = vmatprep.subr.mxu0 0.0
  %1610 = vmatpush1.msra.mxu0 0.0
  %1611 = vmatprep.subr.mxu0 0.0
  %1612 = vmatpush1.msra.mxu0 0.0
  %1613 = vmatprep.subr.mxu0 0.0
  %1614 = vmatpush1.msra.mxu0 0.0
  %1615 = vmatprep.subr.mxu0 0.0
  %1616 = vmatpush1.msra.mxu0 0.0
  %1617 = vmatprep.subr.mxu0 0.0
  %1618 = vmatpush1.msra.mxu0 0.0
  %1619 = vmatprep.subr.mxu0 0.0
  %1620 = vmatpush1.msra.mxu0 0.0
  %1621 = vmatprep.subr.mxu0 0.0
  %1622 = vmatpush1.msra.mxu0 0.0
  %1623 = vmatprep.subr.mxu0 0.0
  %1624 = vmatpush1.msra.mxu0 0.0
  %1625 = vmatprep.subr.mxu0 0.0
  %1626 = vmatpush1.msra.mxu0 0.0
  %1627 = vmatprep.subr.mxu0 0.0
  %1628 = vmatpush1.msra.mxu0 0.0
  %1629 = vmatprep.subr.mxu0 0.0
  %1630 = vmatpush1.msra.mxu0 0.0
  %1631 = vmatprep.subr.mxu0 0.0
  %1632 = vmatpush1.msra.mxu0 0.0
  %1633 = vmatprep.subr.mxu0 0.0
  %1634 = vmatpush1.msra.mxu0 0.0
  %1635 = vmatprep.subr.mxu0 0.0
  %1636 = vmatpush1.msra.mxu0 0.0
  %1637 = vmatprep.subr.mxu0 0.0
  %1638 = vmatpush1.msra.mxu0 0.0
  %1639 = vmatprep.subr.mxu0 0.0
  %1640 = vmatpush1.msra.mxu0 0.0
  %1641 = vmatprep.subr.mxu0 0.0
  %1642 = vmatpush1.msra.mxu0 0.0
  %1643 = vmatprep.subr.mxu0 0.0
  %1644 = vmatpush1.msra.mxu0 0.0
  %1645 = vmatprep.subr.mxu0 0.0
  %1646 = vmatpush1.msra.mxu0 0.0
  %1647 = vmatprep.subr.mxu0 0.0
  %1648 = vmatpush1.msra.mxu0 0.0
  %1649 = vmatprep.subr.mxu0 0.0
  %1650 = vmatpush1.msra.mxu0 0.0
  %1651 = vmatprep.mubr.f32.mxu0 0.0
  %v1652 = vand.u32 %v1157, 4294901760
  %1653 = vmatmul.mubr.f32.gmra.mrb[0].mxu0 %v1652
  %v1654 = vpop.f32.mrb[0].mxu0
  %v1655 = vadd.f32 %v1576, %v1654
  %v1656 = vpop.f32.mrb[0].mxu0
  %1657 = vmatprep.mubr.f32.mxu0 0.0
  %v1658 = vand.u32 %v1160, 4294901760
  %1659 = vmatmul.mubr.f32.gmra.mrb[0].mxu0 %v1658
  %v1660 = vpop.f32.mrb[0].mxu0
  %v1661 = vadd.f32 %v1582, %v1660
  %v1662 = vpop.f32.mrb[0].mxu0
  %1663 = vdwg.mxu0
  %v1664 = vmax.f32 %v1655, 0.0
  %v1665 = vmax.f32 %v1661, 0.0
  %s1666 = scalar_lea.vmem %s1, 72
  %v1667 = vld [vmem:[%s1666] sm:$0xff]
  %v1668 = vld [vmem:[%s1666 + $0x8] sm:$0xff]
  %v1669 = vld [vmem:[%s1666 + $0x10] sm:$0xff]
  %s1670 = scalar_lea.vmem %s2, 72
  %v1671 = vld [vmem:[%s1670] sm:$0xff]
  %v1672 = vld [vmem:[%s1670 + $0x8] sm:$0xff]
  %v1673 = vld [vmem:[%s1670 + $0x10] sm:$0xff]
  %1675 = vset.pattern.permute.xlu0 0
  %1676 = vperm.xlu0 %1675, %v1671
  %v1677 = vpop.permute.xlu0 %1676
  %1680 = vset.pattern.permute.xlu0 0
  %1681 = vperm.xlu0 %1680, %v1672
  %v1682 = vpop.permute.xlu0 %1681
  %1685 = vset.pattern.permute.xlu0 0
  %1686 = vperm.xlu0 %1685, %v1673
  %v1687 = vpop.permute.xlu0 %1686
  %v1690 = vsel %vm1155, %v1667, 0
  %v1693 = vsel %vm1155, %v1668, 0
  %v1696 = vsel %vm1155, %v1669, 0
  %1698 = vmatprep.subr.mxu0 0.0
  %v1699 = vand.u32 %v1664, 4294901760
  %1700 = vmatpush1.msra.mxu0 %v1699
  %1701 = vmatprep.subr.mxu0 0.0
  %v1702 = vand.u32 %v1665, 4294901760
  %1703 = vmatpush1.msra.mxu0 %v1702
  %1704 = vmatprep.subr.mxu0 0.0
  %1705 = vmatpush1.msra.mxu0 0.0
  %1706 = vmatprep.subr.mxu0 0.0
  %1707 = vmatpush1.msra.mxu0 0.0
  %1708 = vmatprep.subr.mxu0 0.0
  %1709 = vmatpush1.msra.mxu0 0.0
  %1710 = vmatprep.subr.mxu0 0.0
  %1711 = vmatpush1.msra.mxu0 0.0
  %1712 = vmatprep.subr.mxu0 0.0
  %1713 = vmatpush1.msra.mxu0 0.0
  %1714 = vmatprep.subr.mxu0 0.0
  %1715 = vmatpush1.msra.mxu0 0.0
  %1716 = vmatprep.subr.mxu0 0.0
  %1717 = vmatpush1.msra.mxu0 0.0
  %1718 = vmatprep.subr.mxu0 0.0
  %1719 = vmatpush1.msra.mxu0 0.0
  %1720 = vmatprep.subr.mxu0 0.0
  %1721 = vmatpush1.msra.mxu0 0.0
  %1722 = vmatprep.subr.mxu0 0.0
  %1723 = vmatpush1.msra.mxu0 0.0
  %1724 = vmatprep.subr.mxu0 0.0
  %1725 = vmatpush1.msra.mxu0 0.0
  %1726 = vmatprep.subr.mxu0 0.0
  %1727 = vmatpush1.msra.mxu0 0.0
  %1728 = vmatprep.subr.mxu0 0.0
  %1729 = vmatpush1.msra.mxu0 0.0
  %1730 = vmatprep.subr.mxu0 0.0
  %1731 = vmatpush1.msra.mxu0 0.0
  %1732 = vmatprep.subr.mxu0 0.0
  %1733 = vmatpush1.msra.mxu0 0.0
  %1734 = vmatprep.subr.mxu0 0.0
  %1735 = vmatpush1.msra.mxu0 0.0
  %1736 = vmatprep.subr.mxu0 0.0
  %1737 = vmatpush1.msra.mxu0 0.0
  %1738 = vmatprep.subr.mxu0 0.0
  %1739 = vmatpush1.msra.mxu0 0.0
  %1740 = vmatprep.subr.mxu0 0.0
  %1741 = vmatpush1.msra.mxu0 0.0
  %1742 = vmatprep.subr.mxu0 0.0
  %1743 = vmatpush1.msra.mxu0 0.0
  %1744 = vmatprep.subr.mxu0 0.0
  %1745 = vmatpush1.msra.mxu0 0.0
  %1746 = vmatprep.subr.mxu0 0.0
  %1747 = vmatpush1.msra.mxu0 0.0
  %1748 = vmatprep.subr.mxu0 0.0
  %1749 = vmatpush1.msra.mxu0 0.0
  %1750 = vmatprep.subr.mxu0 0.0
  %1751 = vmatpush1.msra.mxu0 0.0
  %1752 = vmatprep.subr.mxu0 0.0
  %1753 = vmatpush1.msra.mxu0 0.0
  %1754 = vmatprep.subr.mxu0 0.0
  %1755 = vmatpush1.msra.mxu0 0.0
  %1756 = vmatprep.subr.mxu0 0.0
  %1757 = vmatpush1.msra.mxu0 0.0
  %1758 = vmatprep.subr.mxu0 0.0
  %1759 = vmatpush1.msra.mxu0 0.0
  %1760 = vmatprep.subr.mxu0 0.0
  %1761 = vmatpush1.msra.mxu0 0.0
  %1762 = vmatprep.subr.mxu0 0.0
  %1763 = vmatpush1.msra.mxu0 0.0
  %1764 = vmatprep.mubr.f32.mxu0 0.0
  %v1765 = vand.u32 %v1690, 4294901760
  %v1766 = vsub.f32 %v1690, %v1765
  %v1767 = vand.u32 %v1766, 4294901760
  %v1768 = vsub.f32 %v1766, %v1767
  %v1769 = vand.u32 %v1768, 4294901760
  %1770 = vmatmul.mubr.f32.gmra.mrb[0].mxu0 %v1769
  %v1771 = vpop.f32.mrb[0].mxu0
  %v1772 = vadd.f32 %v1677, %v1771
  %v1773 = vpop.f32.mrb[0].mxu0
  %1774 = vmatprep.mubr.f32.mxu0 0.0
  %v1775 = vand.u32 %v1693, 4294901760
  %v1776 = vsub.f32 %v1693, %v1775
  %v1777 = vand.u32 %v1776, 4294901760
  %v1778 = vsub.f32 %v1776, %v1777
  %v1779 = vand.u32 %v1778, 4294901760
  %1780 = vmatmul.mubr.f32.gmra.mrb[0].mxu0 %v1779
  %v1781 = vpop.f32.mrb[0].mxu0
  %v1782 = vadd.f32 %v1682, %v1781
  %v1783 = vpop.f32.mrb[0].mxu0
  %1784 = vmatprep.mubr.f32.mxu0 0.0
  %v1785 = vand.u32 %v1696, 4294901760
  %v1786 = vsub.f32 %v1696, %v1785
  %v1787 = vand.u32 %v1786, 4294901760
  %v1788 = vsub.f32 %v1786, %v1787
  %v1789 = vand.u32 %v1788, 4294901760
  %1790 = vmatmul.mubr.f32.gmra.mrb[0].mxu0 %v1789
  %v1791 = vpop.f32.mrb[0].mxu0
  %v1792 = vadd.f32 %v1687, %v1791
  %v1793 = vpop.f32.mrb[0].mxu0
  %1794 = vdwg.mxu0
  %1795 = vmatprep.subr.mxu0 0.0
  %v1796 = vand.u32 %v1664, 4294901760
  %v1797 = vsub.f32 %v1664, %v1796
  %v1798 = vand.u32 %v1797, 4294901760
  %v1799 = vsub.f32 %v1797, %v1798
  %v1800 = vand.u32 %v1799, 4294901760
  %1801 = vmatpush1.msra.mxu0 %v1800
  %1802 = vmatprep.subr.mxu0 0.0
  %v1803 = vand.u32 %v1665, 4294901760
  %v1804 = vsub.f32 %v1665, %v1803
  %v1805 = vand.u32 %v1804, 4294901760
  %v1806 = vsub.f32 %v1804, %v1805
  %v1807 = vand.u32 %v1806, 4294901760
  %1808 = vmatpush1.msra.mxu0 %v1807
  %1809 = vmatprep.subr.mxu0 0.0
  %1810 = vmatpush1.msra.mxu0 0.0
  %1811 = vmatprep.subr.mxu0 0.0
  %1812 = vmatpush1.msra.mxu0 0.0
  %1813 = vmatprep.subr.mxu0 0.0
  %1814 = vmatpush1.msra.mxu0 0.0
  %1815 = vmatprep.subr.mxu0 0.0
  %1816 = vmatpush1.msra.mxu0 0.0
  %1817 = vmatprep.subr.mxu0 0.0
  %1818 = vmatpush1.msra.mxu0 0.0
  %1819 = vmatprep.subr.mxu0 0.0
  %1820 = vmatpush1.msra.mxu0 0.0
  %1821 = vmatprep.subr.mxu0 0.0
  %1822 = vmatpush1.msra.mxu0 0.0
  %1823 = vmatprep.subr.mxu0 0.0
  %1824 = vmatpush1.msra.mxu0 0.0
  %1825 = vmatprep.subr.mxu0 0.0
  %1826 = vmatpush1.msra.mxu0 0.0
  %1827 = vmatprep.subr.mxu0 0.0
  %1828 = vmatpush1.msra.mxu0 0.0
  %1829 = vmatprep.subr.mxu0 0.0
  %1830 = vmatpush1.msra.mxu0 0.0
  %1831 = vmatprep.subr.mxu0 0.0
  %1832 = vmatpush1.msra.mxu0 0.0
  %1833 = vmatprep.subr.mxu0 0.0
  %1834 = vmatpush1.msra.mxu0 0.0
  %1835 = vmatprep.subr.mxu0 0.0
  %1836 = vmatpush1.msra.mxu0 0.0
  %1837 = vmatprep.subr.mxu0 0.0
  %1838 = vmatpush1.msra.mxu0 0.0
  %1839 = vmatprep.subr.mxu0 0.0
  %1840 = vmatpush1.msra.mxu0 0.0
  %1841 = vmatprep.subr.mxu0 0.0
  %1842 = vmatpush1.msra.mxu0 0.0
  %1843 = vmatprep.subr.mxu0 0.0
  %1844 = vmatpush1.msra.mxu0 0.0
  %1845 = vmatprep.subr.mxu0 0.0
  %1846 = vmatpush1.msra.mxu0 0.0
  %1847 = vmatprep.subr.mxu0 0.0
  %1848 = vmatpush1.msra.mxu0 0.0
  %1849 = vmatprep.subr.mxu0 0.0
  %1850 = vmatpush1.msra.mxu0 0.0
  %1851 = vmatprep.subr.mxu0 0.0
  %1852 = vmatpush1.msra.mxu0 0.0
  %1853 = vmatprep.subr.mxu0 0.0
  %1854 = vmatpush1.msra.mxu0 0.0
  %1855 = vmatprep.subr.mxu0 0.0
  %1856 = vmatpush1.msra.mxu0 0.0
  %1857 = vmatprep.subr.mxu0 0.0
  %1858 = vmatpush1.msra.mxu0 0.0
  %1859 = vmatprep.subr.mxu0 0.0
  %1860 = vmatpush1.msra.mxu0 0.0
  %1861 = vmatprep.subr.mxu0 0.0
  %1862 = vmatpush1.msra.mxu0 0.0
  %1863 = vmatprep.subr.mxu0 0.0
  %1864 = vmatpush1.msra.mxu0 0.0
  %1865 = vmatprep.subr.mxu0 0.0
  %1866 = vmatpush1.msra.mxu0 0.0
  %1867 = vmatprep.subr.mxu0 0.0
  %1868 = vmatpush1.msra.mxu0 0.0
  %1869 = vmatprep.mubr.f32.mxu0 0.0
  %v1870 = vand.u32 %v1690, 4294901760
  %1871 = vmatmul.mubr.f32.gmra.mrb[0].mxu0 %v1870
  %v1872 = vpop.f32.mrb[0].mxu0
  %v1873 = vadd.f32 %v1772, %v1872
  %v1874 = vpop.f32.mrb[0].mxu0
  %1875 = vmatprep.mubr.f32.mxu0 0.0
  %v1876 = vand.u32 %v1693, 4294901760
  %1877 = vmatmul.mubr.f32.gmra.mrb[0].mxu0 %v1876
  %v1878 = vpop.f32.mrb[0].mxu0
  %v1879 = vadd.f32 %v1782, %v1878
  %v1880 = vpop.f32.mrb[0].mxu0
  %1881 = vmatprep.mubr.f32.mxu0 0.0
  %v1882 = vand.u32 %v1696, 4294901760
  %1883 = vmatmul.mubr.f32.gmra.mrb[0].mxu0 %v1882
  %v1884 = vpop.f32.mrb[0].mxu0
  %v1885 = vadd.f32 %v1792, %v1884
  %v1886 = vpop.f32.mrb[0].mxu0
  %1887 = vdwg.mxu0
  %1888 = vmatprep.subr.mxu0 0.0
  %v1889 = vand.u32 %v1664, 4294901760
  %v1890 = vsub.f32 %v1664, %v1889
  %1891 = vmatpush1.msra.mxu0 %v1890
  %1892 = vmatprep.subr.mxu0 0.0
  %v1893 = vand.u32 %v1665, 4294901760
  %v1894 = vsub.f32 %v1665, %v1893
  %1895 = vmatpush1.msra.mxu0 %v1894
  %1896 = vmatprep.subr.mxu0 0.0
  %1897 = vmatpush1.msra.mxu0 0.0
  %1898 = vmatprep.subr.mxu0 0.0
  %1899 = vmatpush1.msra.mxu0 0.0
  %1900 = vmatprep.subr.mxu0 0.0
  %1901 = vmatpush1.msra.mxu0 0.0
  %1902 = vmatprep.subr.mxu0 0.0
  %1903 = vmatpush1.msra.mxu0 0.0
  %1904 = vmatprep.subr.mxu0 0.0
  %1905 = vmatpush1.msra.mxu0 0.0
  %1906 = vmatprep.subr.mxu0 0.0
  %1907 = vmatpush1.msra.mxu0 0.0
  %1908 = vmatprep.subr.mxu0 0.0
  %1909 = vmatpush1.msra.mxu0 0.0
  %1910 = vmatprep.subr.mxu0 0.0
  %1911 = vmatpush1.msra.mxu0 0.0
  %1912 = vmatprep.subr.mxu0 0.0
  %1913 = vmatpush1.msra.mxu0 0.0
  %1914 = vmatprep.subr.mxu0 0.0
  %1915 = vmatpush1.msra.mxu0 0.0
  %1916 = vmatprep.subr.mxu0 0.0
  %1917 = vmatpush1.msra.mxu0 0.0
  %1918 = vmatprep.subr.mxu0 0.0
  %1919 = vmatpush1.msra.mxu0 0.0
  %1920 = vmatprep.subr.mxu0 0.0
  %1921 = vmatpush1.msra.mxu0 0.0
  %1922 = vmatprep.subr.mxu0 0.0
  %1923 = vmatpush1.msra.mxu0 0.0
  %1924 = vmatprep.subr.mxu0 0.0
  %1925 = vmatpush1.msra.mxu0 0.0
  %1926 = vmatprep.subr.mxu0 0.0
  %1927 = vmatpush1.msra.mxu0 0.0
  %1928 = vmatprep.subr.mxu0 0.0
  %1929 = vmatpush1.msra.mxu0 0.0
  %1930 = vmatprep.subr.mxu0 0.0
  %1931 = vmatpush1.msra.mxu0 0.0
  %1932 = vmatprep.subr.mxu0 0.0
  %1933 = vmatpush1.msra.mxu0 0.0
  %1934 = vmatprep.subr.mxu0 0.0
  %1935 = vmatpush1.msra.mxu0 0.0
  %1936 = vmatprep.subr.mxu0 0.0
  %1937 = vmatpush1.msra.mxu0 0.0
  %1938 = vmatprep.subr.mxu0 0.0
  %1939 = vmatpush1.msra.mxu0 0.0
  %1940 = vmatprep.subr.mxu0 0.0
  %1941 = vmatpush1.msra.mxu0 0.0
  %1942 = vmatprep.subr.mxu0 0.0
  %1943 = vmatpush1.msra.mxu0 0.0
  %1944 = vmatprep.subr.mxu0 0.0
  %1945 = vmatpush1.msra.mxu0 0.0
  %1946 = vmatprep.subr.mxu0 0.0
  %1947 = vmatpush1.msra.mxu0 0.0
  %1948 = vmatprep.subr.mxu0 0.0
  %1949 = vmatpush1.msra.mxu0 0.0
  %1950 = vmatprep.subr.mxu0 0.0
  %1951 = vmatpush1.msra.mxu0 0.0
  %1952 = vmatprep.subr.mxu0 0.0
  %1953 = vmatpush1.msra.mxu0 0.0
  %1954 = vmatprep.subr.mxu0 0.0
  %1955 = vmatpush1.msra.mxu0 0.0
  %1956 = vmatprep.mubr.f32.mxu0 0.0
  %v1957 = vand.u32 %v1690, 4294901760
  %v1958 = vsub.f32 %v1690, %v1957
  %1959 = vmatmul.mubr.f32.gmra.mrb[0].mxu0 %v1958
  %v1960 = vpop.f32.mrb[0].mxu0
  %v1961 = vadd.f32 %v1873, %v1960
  %v1962 = vpop.f32.mrb[0].mxu0
  %1963 = vmatprep.mubr.f32.mxu0 0.0
  %v1964 = vand.u32 %v1693, 4294901760
  %v1965 = vsub.f32 %v1693, %v1964
  %1966 = vmatmul.mubr.f32.gmra.mrb[0].mxu0 %v1965
  %v1967 = vpop.f32.mrb[0].mxu0
  %v1968 = vadd.f32 %v1879, %v1967
  %v1969 = vpop.f32.mrb[0].mxu0
  %1970 = vmatprep.mubr.f32.mxu0 0.0
  %v1971 = vand.u32 %v1696, 4294901760
  %v1972 = vsub.f32 %v1696, %v1971
  %1973 = vmatmul.mubr.f32.gmra.mrb[0].mxu0 %v1972
  %v1974 = vpop.f32.mrb[0].mxu0
  %v1975 = vadd.f32 %v1885, %v1974
  %v1976 = vpop.f32.mrb[0].mxu0
  %1977 = vdwg.mxu0
  %1978 = vmatprep.subr.mxu0 0.0
  %v1979 = vand.u32 %v1664, 4294901760
  %1980 = vmatpush1.msra.mxu0 %v1979
  %1981 = vmatprep.subr.mxu0 0.0
  %v1982 = vand.u32 %v1665, 4294901760
  %1983 = vmatpush1.msra.mxu0 %v1982
  %1984 = vmatprep.subr.mxu0 0.0
  %1985 = vmatpush1.msra.mxu0 0.0
  %1986 = vmatprep.subr.mxu0 0.0
  %1987 = vmatpush1.msra.mxu0 0.0
  %1988 = vmatprep.subr.mxu0 0.0
  %1989 = vmatpush1.msra.mxu0 0.0
  %1990 = vmatprep.subr.mxu0 0.0
  %1991 = vmatpush1.msra.mxu0 0.0
  %1992 = vmatprep.subr.mxu0 0.0
  %1993 = vmatpush1.msra.mxu0 0.0
  %1994 = vmatprep.subr.mxu0 0.0
  %1995 = vmatpush1.msra.mxu0 0.0
  %1996 = vmatprep.subr.mxu0 0.0
  %1997 = vmatpush1.msra.mxu0 0.0
  %1998 = vmatprep.subr.mxu0 0.0
  %1999 = vmatpush1.msra.mxu0 0.0
  %2000 = vmatprep.subr.mxu0 0.0
  %2001 = vmatpush1.msra.mxu0 0.0
  %2002 = vmatprep.subr.mxu0 0.0
  %2003 = vmatpush1.msra.mxu0 0.0
  %2004 = vmatprep.subr.mxu0 0.0
  %2005 = vmatpush1.msra.mxu0 0.0
  %2006 = vmatprep.subr.mxu0 0.0
  %2007 = vmatpush1.msra.mxu0 0.0
  %2008 = vmatprep.subr.mxu0 0.0
  %2009 = vmatpush1.msra.mxu0 0.0
  %2010 = vmatprep.subr.mxu0 0.0
  %2011 = vmatpush1.msra.mxu0 0.0
  %2012 = vmatprep.subr.mxu0 0.0
  %2013 = vmatpush1.msra.mxu0 0.0
  %2014 = vmatprep.subr.mxu0 0.0
  %2015 = vmatpush1.msra.mxu0 0.0
  %2016 = vmatprep.subr.mxu0 0.0
  %2017 = vmatpush1.msra.mxu0 0.0
  %2018 = vmatprep.subr.mxu0 0.0
  %2019 = vmatpush1.msra.mxu0 0.0
  %2020 = vmatprep.subr.mxu0 0.0
  %2021 = vmatpush1.msra.mxu0 0.0
  %2022 = vmatprep.subr.mxu0 0.0
  %2023 = vmatpush1.msra.mxu0 0.0
  %2024 = vmatprep.subr.mxu0 0.0
  %2025 = vmatpush1.msra.mxu0 0.0
  %2026 = vmatprep.subr.mxu0 0.0
  %2027 = vmatpush1.msra.mxu0 0.0
  %2028 = vmatprep.subr.mxu0 0.0
  %2029 = vmatpush1.msra.mxu0 0.0
  %2030 = vmatprep.subr.mxu0 0.0
  %2031 = vmatpush1.msra.mxu0 0.0
  %2032 = vmatprep.subr.mxu0 0.0
  %2033 = vmatpush1.msra.mxu0 0.0
  %2034 = vmatprep.subr.mxu0 0.0
  %2035 = vmatpush1.msra.mxu0 0.0
  %2036 = vmatprep.subr.mxu0 0.0
  %2037 = vmatpush1.msra.mxu0 0.0
  %2038 = vmatprep.subr.mxu0 0.0
  %2039 = vmatpush1.msra.mxu0 0.0
  %2040 = vmatprep.subr.mxu0 0.0
  %2041 = vmatpush1.msra.mxu0 0.0
  %2042 = vmatprep.subr.mxu0 0.0
  %2043 = vmatpush1.msra.mxu0 0.0
  %2044 = vmatprep.mubr.f32.mxu0 0.0
  %v2045 = vand.u32 %v1690, 4294901760
  %v2046 = vsub.f32 %v1690, %v2045
  %v2047 = vand.u32 %v2046, 4294901760
  %2048 = vmatmul.mubr.f32.gmra.mrb[0].mxu0 %v2047
  %v2049 = vpop.f32.mrb[0].mxu0
  %v2050 = vadd.f32 %v1961, %v2049
  %v2051 = vpop.f32.mrb[0].mxu0
  %2052 = vmatprep.mubr.f32.mxu0 0.0
  %v2053 = vand.u32 %v1693, 4294901760
  %v2054 = vsub.f32 %v1693, %v2053
  %v2055 = vand.u32 %v2054, 4294901760
  %2056 = vmatmul.mubr.f32.gmra.mrb[0].mxu0 %v2055
  %v2057 = vpop.f32.mrb[0].mxu0
  %v2058 = vadd.f32 %v1968, %v2057
  %v2059 = vpop.f32.mrb[0].mxu0
  %2060 = vmatprep.mubr.f32.mxu0 0.0
  %v2061 = vand.u32 %v1696, 4294901760
  %v2062 = vsub.f32 %v1696, %v2061
  %v2063 = vand.u32 %v2062, 4294901760
  %2064 = vmatmul.mubr.f32.gmra.mrb[0].mxu0 %v2063
  %v2065 = vpop.f32.mrb[0].mxu0
  %v2066 = vadd.f32 %v1975, %v2065
  %v2067 = vpop.f32.mrb[0].mxu0
  %2068 = vdwg.mxu0
  %2069 = vmatprep.subr.mxu0 0.0
  %v2070 = vand.u32 %v1664, 4294901760
  %v2071 = vsub.f32 %v1664, %v2070
  %v2072 = vand.u32 %v2071, 4294901760
  %2073 = vmatpush1.msra.mxu0 %v2072
  %2074 = vmatprep.subr.mxu0 0.0
  %v2075 = vand.u32 %v1665, 4294901760
  %v2076 = vsub.f32 %v1665, %v2075
  %v2077 = vand.u32 %v2076, 4294901760
  %2078 = vmatpush1.msra.mxu0 %v2077
  %2079 = vmatprep.subr.mxu0 0.0
  %2080 = vmatpush1.msra.mxu0 0.0
  %2081 = vmatprep.subr.mxu0 0.0
  %2082 = vmatpush1.msra.mxu0 0.0
  %2083 = vmatprep.subr.mxu0 0.0
  %2084 = vmatpush1.msra.mxu0 0.0
  %2085 = vmatprep.subr.mxu0 0.0
  %2086 = vmatpush1.msra.mxu0 0.0
  %2087 = vmatprep.subr.mxu0 0.0
  %2088 = vmatpush1.msra.mxu0 0.0
  %2089 = vmatprep.subr.mxu0 0.0
  %2090 = vmatpush1.msra.mxu0 0.0
  %2091 = vmatprep.subr.mxu0 0.0
  %2092 = vmatpush1.msra.mxu0 0.0
  %2093 = vmatprep.subr.mxu0 0.0
  %2094 = vmatpush1.msra.mxu0 0.0
  %2095 = vmatprep.subr.mxu0 0.0
  %2096 = vmatpush1.msra.mxu0 0.0
  %2097 = vmatprep.subr.mxu0 0.0
  %2098 = vmatpush1.msra.mxu0 0.0
  %2099 = vmatprep.subr.mxu0 0.0
  %2100 = vmatpush1.msra.mxu0 0.0
  %2101 = vmatprep.subr.mxu0 0.0
  %2102 = vmatpush1.msra.mxu0 0.0
  %2103 = vmatprep.subr.mxu0 0.0
  %2104 = vmatpush1.msra.mxu0 0.0
  %2105 = vmatprep.subr.mxu0 0.0
  %2106 = vmatpush1.msra.mxu0 0.0
  %2107 = vmatprep.subr.mxu0 0.0
  %2108 = vmatpush1.msra.mxu0 0.0
  %2109 = vmatprep.subr.mxu0 0.0
  %2110 = vmatpush1.msra.mxu0 0.0
  %2111 = vmatprep.subr.mxu0 0.0
  %2112 = vmatpush1.msra.mxu0 0.0
  %2113 = vmatprep.subr.mxu0 0.0
  %2114 = vmatpush1.msra.mxu0 0.0
  %2115 = vmatprep.subr.mxu0 0.0
  %2116 = vmatpush1.msra.mxu0 0.0
  %2117 = vmatprep.subr.mxu0 0.0
  %2118 = vmatpush1.msra.mxu0 0.0
  %2119 = vmatprep.subr.mxu0 0.0
  %2120 = vmatpush1.msra.mxu0 0.0
  %2121 = vmatprep.subr.mxu0 0.0
  %2122 = vmatpush1.msra.mxu0 0.0
  %2123 = vmatprep.subr.mxu0 0.0
  %2124 = vmatpush1.msra.mxu0 0.0
  %2125 = vmatprep.subr.mxu0 0.0
  %2126 = vmatpush1.msra.mxu0 0.0
  %2127 = vmatprep.subr.mxu0 0.0
  %2128 = vmatpush1.msra.mxu0 0.0
  %2129 = vmatprep.subr.mxu0 0.0
  %2130 = vmatpush1.msra.mxu0 0.0
  %2131 = vmatprep.subr.mxu0 0.0
  %2132 = vmatpush1.msra.mxu0 0.0
  %2133 = vmatprep.subr.mxu0 0.0
  %2134 = vmatpush1.msra.mxu0 0.0
  %2135 = vmatprep.subr.mxu0 0.0
  %2136 = vmatpush1.msra.mxu0 0.0
  %2137 = vmatprep.subr.mxu0 0.0
  %2138 = vmatpush1.msra.mxu0 0.0
  %2139 = vmatprep.mubr.f32.mxu0 0.0
  %v2140 = vand.u32 %v1690, 4294901760
  %2141 = vmatmul.mubr.f32.gmra.mrb[0].mxu0 %v2140
  %v2142 = vpop.f32.mrb[0].mxu0
  %v2143 = vadd.f32 %v2050, %v2142
  %v2144 = vpop.f32.mrb[0].mxu0
  %2145 = vmatprep.mubr.f32.mxu0 0.0
  %v2146 = vand.u32 %v1693, 4294901760
  %2147 = vmatmul.mubr.f32.gmra.mrb[0].mxu0 %v2146
  %v2148 = vpop.f32.mrb[0].mxu0
  %v2149 = vadd.f32 %v2058, %v2148
  %v2150 = vpop.f32.mrb[0].mxu0
  %2151 = vmatprep.mubr.f32.mxu0 0.0
  %v2152 = vand.u32 %v1696, 4294901760
  %2153 = vmatmul.mubr.f32.gmra.mrb[0].mxu0 %v2152
  %v2154 = vpop.f32.mrb[0].mxu0
  %v2155 = vadd.f32 %v2066, %v2154
  %v2156 = vpop.f32.mrb[0].mxu0
  %2157 = vdwg.mxu0
  %2158 = vmatprep.subr.mxu0 0.0
  %v2159 = vand.u32 %v1664, 4294901760
  %2160 = vmatpush1.msra.mxu0 %v2159
  %2161 = vmatprep.subr.mxu0 0.0
  %v2162 = vand.u32 %v1665, 4294901760
  %2163 = vmatpush1.msra.mxu0 %v2162
  %2164 = vmatprep.subr.mxu0 0.0
  %2165 = vmatpush1.msra.mxu0 0.0
  %2166 = vmatprep.subr.mxu0 0.0
  %2167 = vmatpush1.msra.mxu0 0.0
  %2168 = vmatprep.subr.mxu0 0.0
  %2169 = vmatpush1.msra.mxu0 0.0
  %2170 = vmatprep.subr.mxu0 0.0
  %2171 = vmatpush1.msra.mxu0 0.0
  %2172 = vmatprep.subr.mxu0 0.0
  %2173 = vmatpush1.msra.mxu0 0.0
  %2174 = vmatprep.subr.mxu0 0.0
  %2175 = vmatpush1.msra.mxu0 0.0
  %2176 = vmatprep.subr.mxu0 0.0
  %2177 = vmatpush1.msra.mxu0 0.0
  %2178 = vmatprep.subr.mxu0 0.0
  %2179 = vmatpush1.msra.mxu0 0.0
  %2180 = vmatprep.subr.mxu0 0.0
  %2181 = vmatpush1.msra.mxu0 0.0
  %2182 = vmatprep.subr.mxu0 0.0
  %2183 = vmatpush1.msra.mxu0 0.0
  %2184 = vmatprep.subr.mxu0 0.0
  %2185 = vmatpush1.msra.mxu0 0.0
  %2186 = vmatprep.subr.mxu0 0.0
  %2187 = vmatpush1.msra.mxu0 0.0
  %2188 = vmatprep.subr.mxu0 0.0
  %2189 = vmatpush1.msra.mxu0 0.0
  %2190 = vmatprep.subr.mxu0 0.0
  %2191 = vmatpush1.msra.mxu0 0.0
  %2192 = vmatprep.subr.mxu0 0.0
  %2193 = vmatpush1.msra.mxu0 0.0
  %2194 = vmatprep.subr.mxu0 0.0
  %2195 = vmatpush1.msra.mxu0 0.0
  %2196 = vmatprep.subr.mxu0 0.0
  %2197 = vmatpush1.msra.mxu0 0.0
  %2198 = vmatprep.subr.mxu0 0.0
  %2199 = vmatpush1.msra.mxu0 0.0
  %2200 = vmatprep.subr.mxu0 0.0
  %2201 = vmatpush1.msra.mxu0 0.0
  %2202 = vmatprep.subr.mxu0 0.0
  %2203 = vmatpush1.msra.mxu0 0.0
  %2204 = vmatprep.subr.mxu0 0.0
  %2205 = vmatpush1.msra.mxu0 0.0
  %2206 = vmatprep.subr.mxu0 0.0
  %2207 = vmatpush1.msra.mxu0 0.0
  %2208 = vmatprep.subr.mxu0 0.0
  %2209 = vmatpush1.msra.mxu0 0.0
  %2210 = vmatprep.subr.mxu0 0.0
  %2211 = vmatpush1.msra.mxu0 0.0
  %2212 = vmatprep.subr.mxu0 0.0
  %2213 = vmatpush1.msra.mxu0 0.0
  %2214 = vmatprep.subr.mxu0 0.0
  %2215 = vmatpush1.msra.mxu0 0.0
  %2216 = vmatprep.subr.mxu0 0.0
  %2217 = vmatpush1.msra.mxu0 0.0
  %2218 = vmatprep.subr.mxu0 0.0
  %2219 = vmatpush1.msra.mxu0 0.0
  %2220 = vmatprep.subr.mxu0 0.0
  %2221 = vmatpush1.msra.mxu0 0.0
  %2222 = vmatprep.subr.mxu0 0.0
  %2223 = vmatpush1.msra.mxu0 0.0
  %2224 = vmatprep.mubr.f32.mxu0 0.0
  %v2225 = vand.u32 %v1690, 4294901760
  %2226 = vmatmul.mubr.f32.gmra.mrb[0].mxu0 %v2225
  %v2227 = vpop.f32.mrb[0].mxu0
  %v2228 = vadd.f32 %v2143, %v2227
  %v2229 = vpop.f32.mrb[0].mxu0
  %2230 = vmatprep.mubr.f32.mxu0 0.0
  %v2231 = vand.u32 %v1693, 4294901760
  %2232 = vmatmul.mubr.f32.gmra.mrb[0].mxu0 %v2231
  %v2233 = vpop.f32.mrb[0].mxu0
  %v2234 = vadd.f32 %v2149, %v2233
  %v2235 = vpop.f32.mrb[0].mxu0
  %2236 = vmatprep.mubr.f32.mxu0 0.0
  %v2237 = vand.u32 %v1696, 4294901760
  %2238 = vmatmul.mubr.f32.gmra.mrb[0].mxu0 %v2237
  %v2239 = vpop.f32.mrb[0].mxu0
  %v2240 = vadd.f32 %v2155, %v2239
  %v2241 = vpop.f32.mrb[0].mxu0
  %2242 = vdwg.mxu0
  %v2243 = vmax.f32 %v2228, 0.0
  %v2244 = vmax.f32 %v2234, 0.0
  %v2245 = vmax.f32 %v2240, 0.0
  %s2246 = scalar_lea.vmem %s1, 96
  %v2247 = vld [vmem:[%s2246] sm:$0xff]
  %v2248 = vld [vmem:[%s2246 + $0x8] sm:$0xff]
  %s2249 = scalar_lea.vmem %s2, 96
  %v2250 = vld [vmem:[%s2249] sm:$0xff]
  %v2251 = vld [vmem:[%s2249 + $0x8] sm:$0xff]
  %2253 = vset.pattern.permute.xlu0 0
  %2254 = vperm.xlu0 %2253, %v2250
  %v2255 = vpop.permute.xlu0 %2254
  %2258 = vset.pattern.permute.xlu0 0
  %2259 = vperm.xlu0 %2258, %v2251
  %v2260 = vpop.permute.xlu0 %2259
  %v2263 = vsel %vm615, %v2247, 0
  %v2266 = vsel %vm615, %v2248, 0
  %2268 = vmatprep.subr.mxu0 0.0
  %v2269 = vand.u32 %v2243, 4294901760
  %2270 = vmatpush1.msra.mxu0 %v2269
  %2271 = vmatprep.subr.mxu0 0.0
  %v2272 = vand.u32 %v2244, 4294901760
  %2273 = vmatpush1.msra.mxu0 %v2272
  %2274 = vmatprep.subr.mxu0 0.0
  %v2275 = vand.u32 %v2245, 4294901760
  %2276 = vmatpush1.msra.mxu0 %v2275
  %2277 = vmatprep.subr.mxu0 0.0
  %2278 = vmatpush1.msra.mxu0 0.0
  %2279 = vmatprep.subr.mxu0 0.0
  %2280 = vmatpush1.msra.mxu0 0.0
  %2281 = vmatprep.subr.mxu0 0.0
  %2282 = vmatpush1.msra.mxu0 0.0
  %2283 = vmatprep.subr.mxu0 0.0
  %2284 = vmatpush1.msra.mxu0 0.0
  %2285 = vmatprep.subr.mxu0 0.0
  %2286 = vmatpush1.msra.mxu0 0.0
  %2287 = vmatprep.subr.mxu0 0.0
  %2288 = vmatpush1.msra.mxu0 0.0
  %2289 = vmatprep.subr.mxu0 0.0
  %2290 = vmatpush1.msra.mxu0 0.0
  %2291 = vmatprep.subr.mxu0 0.0
  %2292 = vmatpush1.msra.mxu0 0.0
  %2293 = vmatprep.subr.mxu0 0.0
  %2294 = vmatpush1.msra.mxu0 0.0
  %2295 = vmatprep.subr.mxu0 0.0
  %2296 = vmatpush1.msra.mxu0 0.0
  %2297 = vmatprep.subr.mxu0 0.0
  %2298 = vmatpush1.msra.mxu0 0.0
  %2299 = vmatprep.subr.mxu0 0.0
  %2300 = vmatpush1.msra.mxu0 0.0
  %2301 = vmatprep.subr.mxu0 0.0
  %2302 = vmatpush1.msra.mxu0 0.0
  %2303 = vmatprep.subr.mxu0 0.0
  %2304 = vmatpush1.msra.mxu0 0.0
  %2305 = vmatprep.subr.mxu0 0.0
  %2306 = vmatpush1.msra.mxu0 0.0
  %2307 = vmatprep.subr.mxu0 0.0
  %2308 = vmatpush1.msra.mxu0 0.0
  %2309 = vmatprep.subr.mxu0 0.0
  %2310 = vmatpush1.msra.mxu0 0.0
  %2311 = vmatprep.subr.mxu0 0.0
  %2312 = vmatpush1.msra.mxu0 0.0
  %2313 = vmatprep.subr.mxu0 0.0
  %2314 = vmatpush1.msra.mxu0 0.0
  %2315 = vmatprep.subr.mxu0 0.0
  %2316 = vmatpush1.msra.mxu0 0.0
  %2317 = vmatprep.subr.mxu0 0.0
  %2318 = vmatpush1.msra.mxu0 0.0
  %2319 = vmatprep.subr.mxu0 0.0
  %2320 = vmatpush1.msra.mxu0 0.0
  %2321 = vmatprep.subr.mxu0 0.0
  %2322 = vmatpush1.msra.mxu0 0.0
  %2323 = vmatprep.subr.mxu0 0.0
  %2324 = vmatpush1.msra.mxu0 0.0
  %2325 = vmatprep.subr.mxu0 0.0
  %2326 = vmatpush1.msra.mxu0 0.0
  %2327 = vmatprep.subr.mxu0 0.0
  %2328 = vmatpush1.msra.mxu0 0.0
  %2329 = vmatprep.subr.mxu0 0.0
  %2330 = vmatpush1.msra.mxu0 0.0
  %2331 = vmatprep.subr.mxu0 0.0
  %2332 = vmatpush1.msra.mxu0 0.0
  %2333 = vmatprep.subr.mxu0 0.0
  %2334 = vmatpush1.msra.mxu0 0.0
  %2335 = vmatprep.mubr.f32.mxu0 0.0
  %v2336 = vand.u32 %v2263, 4294901760
  %v2337 = vsub.f32 %v2263, %v2336
  %v2338 = vand.u32 %v2337, 4294901760
  %v2339 = vsub.f32 %v2337, %v2338
  %v2340 = vand.u32 %v2339, 4294901760
  %2341 = vmatmul.mubr.f32.gmra.mrb[0].mxu0 %v2340
  %v2342 = vpop.f32.mrb[0].mxu0
  %v2343 = vadd.f32 %v2255, %v2342
  %v2344 = vpop.f32.mrb[0].mxu0
  %2345 = vmatprep.mubr.f32.mxu0 0.0
  %v2346 = vand.u32 %v2266, 4294901760
  %v2347 = vsub.f32 %v2266, %v2346
  %v2348 = vand.u32 %v2347, 4294901760
  %v2349 = vsub.f32 %v2347, %v2348
  %v2350 = vand.u32 %v2349, 4294901760
  %2351 = vmatmul.mubr.f32.gmra.mrb[0].mxu0 %v2350
  %v2352 = vpop.f32.mrb[0].mxu0
  %v2353 = vadd.f32 %v2260, %v2352
  %v2354 = vpop.f32.mrb[0].mxu0
  %2355 = vdwg.mxu0
  %2356 = vmatprep.subr.mxu0 0.0
  %v2357 = vand.u32 %v2243, 4294901760
  %v2358 = vsub.f32 %v2243, %v2357
  %v2359 = vand.u32 %v2358, 4294901760
  %v2360 = vsub.f32 %v2358, %v2359
  %v2361 = vand.u32 %v2360, 4294901760
  %2362 = vmatpush1.msra.mxu0 %v2361
  %2363 = vmatprep.subr.mxu0 0.0
  %v2364 = vand.u32 %v2244, 4294901760
  %v2365 = vsub.f32 %v2244, %v2364
  %v2366 = vand.u32 %v2365, 4294901760
  %v2367 = vsub.f32 %v2365, %v2366
  %v2368 = vand.u32 %v2367, 4294901760
  %2369 = vmatpush1.msra.mxu0 %v2368
  %2370 = vmatprep.subr.mxu0 0.0
  %v2371 = vand.u32 %v2245, 4294901760
  %v2372 = vsub.f32 %v2245, %v2371
  %v2373 = vand.u32 %v2372, 4294901760
  %v2374 = vsub.f32 %v2372, %v2373
  %v2375 = vand.u32 %v2374, 4294901760
  %2376 = vmatpush1.msra.mxu0 %v2375
  %2377 = vmatprep.subr.mxu0 0.0
  %2378 = vmatpush1.msra.mxu0 0.0
  %2379 = vmatprep.subr.mxu0 0.0
  %2380 = vmatpush1.msra.mxu0 0.0
  %2381 = vmatprep.subr.mxu0 0.0
  %2382 = vmatpush1.msra.mxu0 0.0
  %2383 = vmatprep.subr.mxu0 0.0
  %2384 = vmatpush1.msra.mxu0 0.0
  %2385 = vmatprep.subr.mxu0 0.0
  %2386 = vmatpush1.msra.mxu0 0.0
  %2387 = vmatprep.subr.mxu0 0.0
  %2388 = vmatpush1.msra.mxu0 0.0
  %2389 = vmatprep.subr.mxu0 0.0
  %2390 = vmatpush1.msra.mxu0 0.0
  %2391 = vmatprep.subr.mxu0 0.0
  %2392 = vmatpush1.msra.mxu0 0.0
  %2393 = vmatprep.subr.mxu0 0.0
  %2394 = vmatpush1.msra.mxu0 0.0
  %2395 = vmatprep.subr.mxu0 0.0
  %2396 = vmatpush1.msra.mxu0 0.0
  %2397 = vmatprep.subr.mxu0 0.0
  %2398 = vmatpush1.msra.mxu0 0.0
  %2399 = vmatprep.subr.mxu0 0.0
  %2400 = vmatpush1.msra.mxu0 0.0
  %2401 = vmatprep.subr.mxu0 0.0
  %2402 = vmatpush1.msra.mxu0 0.0
  %2403 = vmatprep.subr.mxu0 0.0
  %2404 = vmatpush1.msra.mxu0 0.0
  %2405 = vmatprep.subr.mxu0 0.0
  %2406 = vmatpush1.msra.mxu0 0.0
  %2407 = vmatprep.subr.mxu0 0.0
  %2408 = vmatpush1.msra.mxu0 0.0
  %2409 = vmatprep.subr.mxu0 0.0
  %2410 = vmatpush1.msra.mxu0 0.0
  %2411 = vmatprep.subr.mxu0 0.0
  %2412 = vmatpush1.msra.mxu0 0.0
  %2413 = vmatprep.subr.mxu0 0.0
  %2414 = vmatpush1.msra.mxu0 0.0
  %2415 = vmatprep.subr.mxu0 0.0
  %2416 = vmatpush1.msra.mxu0 0.0
  %2417 = vmatprep.subr.mxu0 0.0
  %2418 = vmatpush1.msra.mxu0 0.0
  %2419 = vmatprep.subr.mxu0 0.0
  %2420 = vmatpush1.msra.mxu0 0.0
  %2421 = vmatprep.subr.mxu0 0.0
  %2422 = vmatpush1.msra.mxu0 0.0
  %2423 = vmatprep.subr.mxu0 0.0
  %2424 = vmatpush1.msra.mxu0 0.0
  %2425 = vmatprep.subr.mxu0 0.0
  %2426 = vmatpush1.msra.mxu0 0.0
  %2427 = vmatprep.subr.mxu0 0.0
  %2428 = vmatpush1.msra.mxu0 0.0
  %2429 = vmatprep.subr.mxu0 0.0
  %2430 = vmatpush1.msra.mxu0 0.0
  %2431 = vmatprep.subr.mxu0 0.0
  %2432 = vmatpush1.msra.mxu0 0.0
  %2433 = vmatprep.subr.mxu0 0.0
  %2434 = vmatpush1.msra.mxu0 0.0
  %2435 = vmatprep.mubr.f32.mxu0 0.0
  %v2436 = vand.u32 %v2263, 4294901760
  %2437 = vmatmul.mubr.f32.gmra.mrb[0].mxu0 %v2436
  %v2438 = vpop.f32.mrb[0].mxu0
  %v2439 = vadd.f32 %v2343, %v2438
  %v2440 = vpop.f32.mrb[0].mxu0
  %2441 = vmatprep.mubr.f32.mxu0 0.0
  %v2442 = vand.u32 %v2266, 4294901760
  %2443 = vmatmul.mubr.f32.gmra.mrb[0].mxu0 %v2442
  %v2444 = vpop.f32.mrb[0].mxu0
  %v2445 = vadd.f32 %v2353, %v2444
  %v2446 = vpop.f32.mrb[0].mxu0
  %2447 = vdwg.mxu0
  %2448 = vmatprep.subr.mxu0 0.0
  %v2449 = vand.u32 %v2243, 4294901760
  %v2450 = vsub.f32 %v2243, %v2449
  %2451 = vmatpush1.msra.mxu0 %v2450
  %2452 = vmatprep.subr.mxu0 0.0
  %v2453 = vand.u32 %v2244, 4294901760
  %v2454 = vsub.f32 %v2244, %v2453
  %2455 = vmatpush1.msra.mxu0 %v2454
  %2456 = vmatprep.subr.mxu0 0.0
  %v2457 = vand.u32 %v2245, 4294901760
  %v2458 = vsub.f32 %v2245, %v2457
  %2459 = vmatpush1.msra.mxu0 %v2458
  %2460 = vmatprep.subr.mxu0 0.0
  %2461 = vmatpush1.msra.mxu0 0.0
  %2462 = vmatprep.subr.mxu0 0.0
  %2463 = vmatpush1.msra.mxu0 0.0
  %2464 = vmatprep.subr.mxu0 0.0
  %2465 = vmatpush1.msra.mxu0 0.0
  %2466 = vmatprep.subr.mxu0 0.0
  %2467 = vmatpush1.msra.mxu0 0.0
  %2468 = vmatprep.subr.mxu0 0.0
  %2469 = vmatpush1.msra.mxu0 0.0
  %2470 = vmatprep.subr.mxu0 0.0
  %2471 = vmatpush1.msra.mxu0 0.0
  %2472 = vmatprep.subr.mxu0 0.0
  %2473 = vmatpush1.msra.mxu0 0.0
  %2474 = vmatprep.subr.mxu0 0.0
  %2475 = vmatpush1.msra.mxu0 0.0
  %2476 = vmatprep.subr.mxu0 0.0
  %2477 = vmatpush1.msra.mxu0 0.0
  %2478 = vmatprep.subr.mxu0 0.0
  %2479 = vmatpush1.msra.mxu0 0.0
  %2480 = vmatprep.subr.mxu0 0.0
  %2481 = vmatpush1.msra.mxu0 0.0
  %2482 = vmatprep.subr.mxu0 0.0
  %2483 = vmatpush1.msra.mxu0 0.0
  %2484 = vmatprep.subr.mxu0 0.0
  %2485 = vmatpush1.msra.mxu0 0.0
  %2486 = vmatprep.subr.mxu0 0.0
  %2487 = vmatpush1.msra.mxu0 0.0
  %2488 = vmatprep.subr.mxu0 0.0
  %2489 = vmatpush1.msra.mxu0 0.0
  %2490 = vmatprep.subr.mxu0 0.0
  %2491 = vmatpush1.msra.mxu0 0.0
  %2492 = vmatprep.subr.mxu0 0.0
  %2493 = vmatpush1.msra.mxu0 0.0
  %2494 = vmatprep.subr.mxu0 0.0
  %2495 = vmatpush1.msra.mxu0 0.0
  %2496 = vmatprep.subr.mxu0 0.0
  %2497 = vmatpush1.msra.mxu0 0.0
  %2498 = vmatprep.subr.mxu0 0.0
  %2499 = vmatpush1.msra.mxu0 0.0
  %2500 = vmatprep.subr.mxu0 0.0
  %2501 = vmatpush1.msra.mxu0 0.0
  %2502 = vmatprep.subr.mxu0 0.0
  %2503 = vmatpush1.msra.mxu0 0.0
  %2504 = vmatprep.subr.mxu0 0.0
  %2505 = vmatpush1.msra.mxu0 0.0
  %2506 = vmatprep.subr.mxu0 0.0
  %2507 = vmatpush1.msra.mxu0 0.0
  %2508 = vmatprep.subr.mxu0 0.0
  %2509 = vmatpush1.msra.mxu0 0.0
  %2510 = vmatprep.subr.mxu0 0.0
  %2511 = vmatpush1.msra.mxu0 0.0
  %2512 = vmatprep.subr.mxu0 0.0
  %2513 = vmatpush1.msra.mxu0 0.0
  %2514 = vmatprep.subr.mxu0 0.0
  %2515 = vmatpush1.msra.mxu0 0.0
  %2516 = vmatprep.subr.mxu0 0.0
  %2517 = vmatpush1.msra.mxu0 0.0
  %2518 = vmatprep.mubr.f32.mxu0 0.0
  %v2519 = vand.u32 %v2263, 4294901760
  %v2520 = vsub.f32 %v2263, %v2519
  %2521 = vmatmul.mubr.f32.gmra.mrb[0].mxu0 %v2520
  %v2522 = vpop.f32.mrb[0].mxu0
  %v2523 = vadd.f32 %v2439, %v2522
  %v2524 = vpop.f32.mrb[0].mxu0
  %2525 = vmatprep.mubr.f32.mxu0 0.0
  %v2526 = vand.u32 %v2266, 4294901760
  %v2527 = vsub.f32 %v2266, %v2526
  %2528 = vmatmul.mubr.f32.gmra.mrb[0].mxu0 %v2527
  %v2529 = vpop.f32.mrb[0].mxu0
  %v2530 = vadd.f32 %v2445, %v2529
  %v2531 = vpop.f32.mrb[0].mxu0
  %2532 = vdwg.mxu0
  %2533 = vmatprep.subr.mxu0 0.0
  %v2534 = vand.u32 %v2243, 4294901760
  %2535 = vmatpush1.msra.mxu0 %v2534
  %2536 = vmatprep.subr.mxu0 0.0
  %v2537 = vand.u32 %v2244, 4294901760
  %2538 = vmatpush1.msra.mxu0 %v2537
  %2539 = vmatprep.subr.mxu0 0.0
  %v2540 = vand.u32 %v2245, 4294901760
  %2541 = vmatpush1.msra.mxu0 %v2540
  %2542 = vmatprep.subr.mxu0 0.0
  %2543 = vmatpush1.msra.mxu0 0.0
  %2544 = vmatprep.subr.mxu0 0.0
  %2545 = vmatpush1.msra.mxu0 0.0
  %2546 = vmatprep.subr.mxu0 0.0
  %2547 = vmatpush1.msra.mxu0 0.0
  %2548 = vmatprep.subr.mxu0 0.0
  %2549 = vmatpush1.msra.mxu0 0.0
  %2550 = vmatprep.subr.mxu0 0.0
  %2551 = vmatpush1.msra.mxu0 0.0
  %2552 = vmatprep.subr.mxu0 0.0
  %2553 = vmatpush1.msra.mxu0 0.0
  %2554 = vmatprep.subr.mxu0 0.0
  %2555 = vmatpush1.msra.mxu0 0.0
  %2556 = vmatprep.subr.mxu0 0.0
  %2557 = vmatpush1.msra.mxu0 0.0
  %2558 = vmatprep.subr.mxu0 0.0
  %2559 = vmatpush1.msra.mxu0 0.0
  %2560 = vmatprep.subr.mxu0 0.0
  %2561 = vmatpush1.msra.mxu0 0.0
  %2562 = vmatprep.subr.mxu0 0.0
  %2563 = vmatpush1.msra.mxu0 0.0
  %2564 = vmatprep.subr.mxu0 0.0
  %2565 = vmatpush1.msra.mxu0 0.0
  %2566 = vmatprep.subr.mxu0 0.0
  %2567 = vmatpush1.msra.mxu0 0.0
  %2568 = vmatprep.subr.mxu0 0.0
  %2569 = vmatpush1.msra.mxu0 0.0
  %2570 = vmatprep.subr.mxu0 0.0
  %2571 = vmatpush1.msra.mxu0 0.0
  %2572 = vmatprep.subr.mxu0 0.0
  %2573 = vmatpush1.msra.mxu0 0.0
  %2574 = vmatprep.subr.mxu0 0.0
  %2575 = vmatpush1.msra.mxu0 0.0
  %2576 = vmatprep.subr.mxu0 0.0
  %2577 = vmatpush1.msra.mxu0 0.0
  %2578 = vmatprep.subr.mxu0 0.0
  %2579 = vmatpush1.msra.mxu0 0.0
  %2580 = vmatprep.subr.mxu0 0.0
  %2581 = vmatpush1.msra.mxu0 0.0
  %2582 = vmatprep.subr.mxu0 0.0
  %2583 = vmatpush1.msra.mxu0 0.0
  %2584 = vmatprep.subr.mxu0 0.0
  %2585 = vmatpush1.msra.mxu0 0.0
  %2586 = vmatprep.subr.mxu0 0.0
  %2587 = vmatpush1.msra.mxu0 0.0
  %2588 = vmatprep.subr.mxu0 0.0
  %2589 = vmatpush1.msra.mxu0 0.0
  %2590 = vmatprep.subr.mxu0 0.0
  %2591 = vmatpush1.msra.mxu0 0.0
  %2592 = vmatprep.subr.mxu0 0.0
  %2593 = vmatpush1.msra.mxu0 0.0
  %2594 = vmatprep.subr.mxu0 0.0
  %2595 = vmatpush1.msra.mxu0 0.0
  %2596 = vmatprep.subr.mxu0 0.0
  %2597 = vmatpush1.msra.mxu0 0.0
  %2598 = vmatprep.subr.mxu0 0.0
  %2599 = vmatpush1.msra.mxu0 0.0
  %2600 = vmatprep.mubr.f32.mxu0 0.0
  %v2601 = vand.u32 %v2263, 4294901760
  %v2602 = vsub.f32 %v2263, %v2601
  %v2603 = vand.u32 %v2602, 4294901760
  %2604 = vmatmul.mubr.f32.gmra.mrb[0].mxu0 %v2603
  %v2605 = vpop.f32.mrb[0].mxu0
  %v2606 = vadd.f32 %v2523, %v2605
  %v2607 = vpop.f32.mrb[0].mxu0
  %2608 = vmatprep.mubr.f32.mxu0 0.0
  %v2609 = vand.u32 %v2266, 4294901760
  %v2610 = vsub.f32 %v2266, %v2609
  %v2611 = vand.u32 %v2610, 4294901760
  %2612 = vmatmul.mubr.f32.gmra.mrb[0].mxu0 %v2611
  %v2613 = vpop.f32.mrb[0].mxu0
  %v2614 = vadd.f32 %v2530, %v2613
  %v2615 = vpop.f32.mrb[0].mxu0
  %2616 = vdwg.mxu0
  %2617 = vmatprep.subr.mxu0 0.0
  %v2618 = vand.u32 %v2243, 4294901760
  %v2619 = vsub.f32 %v2243, %v2618
  %v2620 = vand.u32 %v2619, 4294901760
  %2621 = vmatpush1.msra.mxu0 %v2620
  %2622 = vmatprep.subr.mxu0 0.0
  %v2623 = vand.u32 %v2244, 4294901760
  %v2624 = vsub.f32 %v2244, %v2623
  %v2625 = vand.u32 %v2624, 4294901760
  %2626 = vmatpush1.msra.mxu0 %v2625
  %2627 = vmatprep.subr.mxu0 0.0
  %v2628 = vand.u32 %v2245, 4294901760
  %v2629 = vsub.f32 %v2245, %v2628
  %v2630 = vand.u32 %v2629, 4294901760
  %2631 = vmatpush1.msra.mxu0 %v2630
  %2632 = vmatprep.subr.mxu0 0.0
  %2633 = vmatpush1.msra.mxu0 0.0
  %2634 = vmatprep.subr.mxu0 0.0
  %2635 = vmatpush1.msra.mxu0 0.0
  %2636 = vmatprep.subr.mxu0 0.0
  %2637 = vmatpush1.msra.mxu0 0.0
  %2638 = vmatprep.subr.mxu0 0.0
  %2639 = vmatpush1.msra.mxu0 0.0
  %2640 = vmatprep.subr.mxu0 0.0
  %2641 = vmatpush1.msra.mxu0 0.0
  %2642 = vmatprep.subr.mxu0 0.0
  %2643 = vmatpush1.msra.mxu0 0.0
  %2644 = vmatprep.subr.mxu0 0.0
  %2645 = vmatpush1.msra.mxu0 0.0
  %2646 = vmatprep.subr.mxu0 0.0
  %2647 = vmatpush1.msra.mxu0 0.0
  %2648 = vmatprep.subr.mxu0 0.0
  %2649 = vmatpush1.msra.mxu0 0.0
  %2650 = vmatprep.subr.mxu0 0.0
  %2651 = vmatpush1.msra.mxu0 0.0
  %2652 = vmatprep.subr.mxu0 0.0
  %2653 = vmatpush1.msra.mxu0 0.0
  %2654 = vmatprep.subr.mxu0 0.0
  %2655 = vmatpush1.msra.mxu0 0.0
  %2656 = vmatprep.subr.mxu0 0.0
  %2657 = vmatpush1.msra.mxu0 0.0
  %2658 = vmatprep.subr.mxu0 0.0
  %2659 = vmatpush1.msra.mxu0 0.0
  %2660 = vmatprep.subr.mxu0 0.0
  %2661 = vmatpush1.msra.mxu0 0.0
  %2662 = vmatprep.subr.mxu0 0.0
  %2663 = vmatpush1.msra.mxu0 0.0
  %2664 = vmatprep.subr.mxu0 0.0
  %2665 = vmatpush1.msra.mxu0 0.0
  %2666 = vmatprep.subr.mxu0 0.0
  %2667 = vmatpush1.msra.mxu0 0.0
  %2668 = vmatprep.subr.mxu0 0.0
  %2669 = vmatpush1.msra.mxu0 0.0
  %2670 = vmatprep.subr.mxu0 0.0
  %2671 = vmatpush1.msra.mxu0 0.0
  %2672 = vmatprep.subr.mxu0 0.0
  %2673 = vmatpush1.msra.mxu0 0.0
  %2674 = vmatprep.subr.mxu0 0.0
  %2675 = vmatpush1.msra.mxu0 0.0
  %2676 = vmatprep.subr.mxu0 0.0
  %2677 = vmatpush1.msra.mxu0 0.0
  %2678 = vmatprep.subr.mxu0 0.0
  %2679 = vmatpush1.msra.mxu0 0.0
  %2680 = vmatprep.subr.mxu0 0.0
  %2681 = vmatpush1.msra.mxu0 0.0
  %2682 = vmatprep.subr.mxu0 0.0
  %2683 = vmatpush1.msra.mxu0 0.0
  %2684 = vmatprep.subr.mxu0 0.0
  %2685 = vmatpush1.msra.mxu0 0.0
  %2686 = vmatprep.subr.mxu0 0.0
  %2687 = vmatpush1.msra.mxu0 0.0
  %2688 = vmatprep.subr.mxu0 0.0
  %2689 = vmatpush1.msra.mxu0 0.0
  %2690 = vmatprep.mubr.f32.mxu0 0.0
  %v2691 = vand.u32 %v2263, 4294901760
  %2692 = vmatmul.mubr.f32.gmra.mrb[0].mxu0 %v2691
  %v2693 = vpop.f32.mrb[0].mxu0
  %v2694 = vadd.f32 %v2606, %v2693
  %v2695 = vpop.f32.mrb[0].mxu0
  %2696 = vmatprep.mubr.f32.mxu0 0.0
  %v2697 = vand.u32 %v2266, 4294901760
  %2698 = vmatmul.mubr.f32.gmra.mrb[0].mxu0 %v2697
  %v2699 = vpop.f32.mrb[0].mxu0
  %v2700 = vadd.f32 %v2614, %v2699
  %v2701 = vpop.f32.mrb[0].mxu0
  %2702 = vdwg.mxu0
  %2703 = vmatprep.subr.mxu0 0.0
  %v2704 = vand.u32 %v2243, 4294901760
  %2705 = vmatpush1.msra.mxu0 %v2704
  %2706 = vmatprep.subr.mxu0 0.0
  %v2707 = vand.u32 %v2244, 4294901760
  %2708 = vmatpush1.msra.mxu0 %v2707
  %2709 = vmatprep.subr.mxu0 0.0
  %v2710 = vand.u32 %v2245, 4294901760
  %2711 = vmatpush1.msra.mxu0 %v2710
  %2712 = vmatprep.subr.mxu0 0.0
  %2713 = vmatpush1.msra.mxu0 0.0
  %2714 = vmatprep.subr.mxu0 0.0
  %2715 = vmatpush1.msra.mxu0 0.0
  %2716 = vmatprep.subr.mxu0 0.0
  %2717 = vmatpush1.msra.mxu0 0.0
  %2718 = vmatprep.subr.mxu0 0.0
  %2719 = vmatpush1.msra.mxu0 0.0
  %2720 = vmatprep.subr.mxu0 0.0
  %2721 = vmatpush1.msra.mxu0 0.0
  %2722 = vmatprep.subr.mxu0 0.0
  %2723 = vmatpush1.msra.mxu0 0.0
  %2724 = vmatprep.subr.mxu0 0.0
  %2725 = vmatpush1.msra.mxu0 0.0
  %2726 = vmatprep.subr.mxu0 0.0
  %2727 = vmatpush1.msra.mxu0 0.0
  %2728 = vmatprep.subr.mxu0 0.0
  %2729 = vmatpush1.msra.mxu0 0.0
  %2730 = vmatprep.subr.mxu0 0.0
  %2731 = vmatpush1.msra.mxu0 0.0
  %2732 = vmatprep.subr.mxu0 0.0
  %2733 = vmatpush1.msra.mxu0 0.0
  %2734 = vmatprep.subr.mxu0 0.0
  %2735 = vmatpush1.msra.mxu0 0.0
  %2736 = vmatprep.subr.mxu0 0.0
  %2737 = vmatpush1.msra.mxu0 0.0
  %2738 = vmatprep.subr.mxu0 0.0
  %2739 = vmatpush1.msra.mxu0 0.0
  %2740 = vmatprep.subr.mxu0 0.0
  %2741 = vmatpush1.msra.mxu0 0.0
  %2742 = vmatprep.subr.mxu0 0.0
  %2743 = vmatpush1.msra.mxu0 0.0
  %2744 = vmatprep.subr.mxu0 0.0
  %2745 = vmatpush1.msra.mxu0 0.0
  %2746 = vmatprep.subr.mxu0 0.0
  %2747 = vmatpush1.msra.mxu0 0.0
  %2748 = vmatprep.subr.mxu0 0.0
  %2749 = vmatpush1.msra.mxu0 0.0
  %2750 = vmatprep.subr.mxu0 0.0
  %2751 = vmatpush1.msra.mxu0 0.0
  %2752 = vmatprep.subr.mxu0 0.0
  %2753 = vmatpush1.msra.mxu0 0.0
  %2754 = vmatprep.subr.mxu0 0.0
  %2755 = vmatpush1.msra.mxu0 0.0
  %2756 = vmatprep.subr.mxu0 0.0
  %2757 = vmatpush1.msra.mxu0 0.0
  %2758 = vmatprep.subr.mxu0 0.0
  %2759 = vmatpush1.msra.mxu0 0.0
  %2760 = vmatprep.subr.mxu0 0.0
  %2761 = vmatpush1.msra.mxu0 0.0
  %2762 = vmatprep.subr.mxu0 0.0
  %2763 = vmatpush1.msra.mxu0 0.0
  %2764 = vmatprep.subr.mxu0 0.0
  %2765 = vmatpush1.msra.mxu0 0.0
  %2766 = vmatprep.subr.mxu0 0.0
  %2767 = vmatpush1.msra.mxu0 0.0
  %2768 = vmatprep.subr.mxu0 0.0
  %2769 = vmatpush1.msra.mxu0 0.0
  %2770 = vmatprep.mubr.f32.mxu0 0.0
  %v2771 = vand.u32 %v2263, 4294901760
  %2772 = vmatmul.mubr.f32.gmra.mrb[0].mxu0 %v2771
  %v2773 = vpop.f32.mrb[0].mxu0
  %v2774 = vadd.f32 %v2694, %v2773
  %v2775 = vpop.f32.mrb[0].mxu0
  %2776 = vmatprep.mubr.f32.mxu0 0.0
  %v2777 = vand.u32 %v2266, 4294901760
  %2778 = vmatmul.mubr.f32.gmra.mrb[0].mxu0 %v2777
  %v2779 = vpop.f32.mrb[0].mxu0
  %v2780 = vadd.f32 %v2700, %v2779
  %v2781 = vpop.f32.mrb[0].mxu0
  %2782 = vdwg.mxu0
  %vm2783 = vcmask 64512
  %2784 = vst.msk [vmem:[%s3] sm:$0xff] %vm2783, %v2774
  %vm2785 = vcmask 61440
  %2786 = vst.msk [vmem:[%s3 + $0x8] sm:$0x1f] %vm2785, %v2780
  // Predicated region
  $region14: #{boston_housing_ae.1} parent=0 // pred_check
    _
  $region15: #{boston_housing_ae.1} parent=0 // pred_check_branch
    %2788 = sbr.rel (0) target = $region17
  $region16: #{boston_housing_ae.1} parent=0 // pred_region
    _
  $region17: #{boston_housing_ae.1} parent=0 // pred_fallthru
    _
  // Predicated region
  $region18: #{boston_housing_ae.1} parent=0 // pred_check
    _
  $region19: #{boston_housing_ae.1} parent=0 // pred_check_branch
    %2790 = sbr.rel (0) target = $region21
  $region20: #{boston_housing_ae.1} parent=0 // pred_region
    _
  $region21: #{boston_housing_ae.1} parent=0 // pred_fallthru
    _

</llo_original>
